<compile_context>
chip_gen: v7x
topology: tpu7x:2x2x1
jax: 0.10.0
libtpu: 0.0.40
codegen_flags: <defaults>
</compile_context>

<pallas_src>
import functools

import jax
import jax.numpy as jnp
from jax import lax
from jax.experimental import pallas as pl
from jax.experimental.pallas import tpu as pltpu

EPS = 1e-5


# --------------------------------- kernel -----------------------------------

def _bottleneck_kernel(xt_ref, xm_ref, xb_ref, w1_ref, b1_ref, w2_ref, b2_ref,
                       w3_ref, b3_ref, o_ref, m_ref, *, TH, W, Cmid):
    t = pl.program_id(1)
    n_t = pl.num_programs(1)

    w1 = w1_ref[...]
    b1 = b1_ref[...]

    def conv1(x2d, keep):
        # 1x1 conv (BN1 scale folded into w1) + bias + ReLU.  `keep` masks the
        # result to zero when this row lies outside the image (conv2 padding).
        h = jnp.dot(x2d.astype(jnp.bfloat16), w1,
                    preferred_element_type=jnp.float32)
        h = jnp.maximum(h + b1, 0.0)
        h = jnp.where(keep, h, 0.0)
        return h.astype(jnp.bfloat16)

    def scatter_taps(rows, h):
        # m[r, j, dj*Cmid:(dj+1)*Cmid] = h1_width_padded[r, j + dj]
        m_ref[rows, :, Cmid:2 * Cmid] = h                       # center (dj=1)
        m_ref[rows, 1:W, 0:Cmid] = h[:, 0:W - 1]                # left   (dj=0)
        m_ref[rows, 0:W - 1, 2 * Cmid:3 * Cmid] = h[:, 1:W]     # right  (dj=2)

    # ---- conv1 on the interior rows and the two halo rows -------------------
    h1 = conv1(xm_ref[...], True).reshape(TH, W, Cmid)
    scatter_taps(slice(1, TH + 1), h1)
    ht = conv1(xt_ref[...], t > 0).reshape(1, W, Cmid)          # zero at top
    scatter_taps(slice(0, 1), ht)
    hb = conv1(xb_ref[...], t < n_t - 1).reshape(1, W, Cmid)    # zero at bottom
    scatter_taps(slice(TH + 1, TH + 2), hb)

    # width zero-padding columns of the im2col scratch (never written above).
    # TODO(synk): these strips are constant across steps; hoist to a one-time
    #             init once a megacore-safe "first step on this core" predicate
    #             is available.
    zero_col = jnp.zeros((TH + 2, 1, Cmid), jnp.bfloat16)
    m_ref[:, 0:1, 0:Cmid] = zero_col
    m_ref[:, W - 1:W, 2 * Cmid:3 * Cmid] = zero_col

    # ---- conv2 (3x3, pad=1, stride=1): 3 row-tap matmuls, K = 3*Cmid,
    #      accumulated in vregs (no VMEM accumulator) -------------------------
    acc = jnp.dot(m_ref[0:TH].reshape(TH * W, 3 * Cmid), w2_ref[0],
                  preferred_element_type=jnp.float32)
    acc += jnp.dot(m_ref[1:TH + 1].reshape(TH * W, 3 * Cmid), w2_ref[1],
                   preferred_element_type=jnp.float32)
    acc += jnp.dot(m_ref[2:TH + 2].reshape(TH * W, 3 * Cmid), w2_ref[2],
                   preferred_element_type=jnp.float32)
    h2 = jnp.maximum(acc + b2_ref[...], 0.0).astype(jnp.bfloat16)

    # ---- conv3 (1x1) + bn3 + residual add + relu -----------------------------
    h3 = jnp.dot(h2, w3_ref[...],
                 preferred_element_type=jnp.float32) + b3_ref[...]
    identity = xm_ref[...]                     # re-read (bf16) only at epilogue
    out = jnp.maximum(h3 + identity, 0.0)      # promotes to f32
    o_ref[...] = out.astype(o_ref.dtype)


# --------------------------------- wrapper ----------------------------------

def _pick_row_tile(H, N, row_tile):
    th = max(d for d in range(1, min(row_tile, H) + 1) if H % d == 0)
    # keep >= 2 grid steps so both v7x TensorCores get work even at N == 1
    if N * (H // th) < 2 and th > 1:
        smaller = [d for d in range(1, th) if H % d == 0]
        if smaller:
            th = smaller[-1]
    return th


def _vmem_estimate(TH, W, Cin, Cmid, Cout):
    bands = 2 * (TH * W + 2 * W) * Cin * 2            # double-buffered bf16 band
    outs = 2 * TH * W * Cout * 4                      # double-buffered f32 out
    weights = 2 * (Cin * Cmid + 9 * Cmid * Cmid + Cmid * Cout) * 2
    biases = 2 * (2 * Cmid + Cout) * 4
    scratch = (TH + 2) * W * 3 * Cmid * 2
    return bands + outs + weights + biases + scratch


def bottleneck_forward(x_nchw, params, stride=1, row_tile=32):
    """x_nchw: (N, Cin, H, W) float32. Returns (N, Cout, H, W) float32."""
    N, Cin, H, W = x_nchw.shape
    w1k, b1k = params["w1k"], params["b1k"]
    w2k, b2k = params["w2k"], params["b2k"]
    w3k, b3k = params["w3k"], params["b3k"]
    Cmid = w1k.shape[1]
    Cout = w3k.shape[1]

    # TODO(synk): only the stride=1 / downsample=None path is implemented.
    assert stride == 1, "stride > 1 (and downsample) not implemented"
    assert Cin == Cout, "downsample=None requires in_channel == out_channel*4"

    TH = _pick_row_tile(H, N, row_tile)
    n_t = H // TH

    # NCHW -> NHWC (channels on lanes), cast to bf16, flatten spatial dims.
    # TODO(synk): in a full backbone keep activations NHWC bf16 end to end so
    #             this transpose/cast pass over HBM disappears.
    x_flat = jnp.transpose(x_nchw, (0, 2, 3, 1)).astype(jnp.bfloat16)
    x_flat = x_flat.reshape(N, H * W, Cin)

    kernel = functools.partial(_bottleneck_kernel, TH=TH, W=W, Cmid=Cmid)

    grid_spec = pltpu.PrefetchScalarGridSpec(
        num_scalar_prefetch=0,
        grid=(N, n_t),
        in_specs=[
            # halo row above the band (clamped at the image top; value is
            # masked to zero in-kernel when t == 0)
            pl.BlockSpec((None, W, Cin),
                         lambda b, t: (b, jnp.maximum(t * TH - 1, 0), 0)),
            # TH interior rows of the band
            pl.BlockSpec((None, TH * W, Cin), lambda b, t: (b, t, 0)),
            # halo row below the band (clamped at the image bottom)
            pl.BlockSpec((None, W, Cin),
                         lambda b, t: (b, jnp.minimum(t * TH + TH, H - 1), 0)),
            # weights / biases (constant index -> fetched once, kept resident)
            # TODO(synk): for very large Cmid use pipeline_mode=pl.Buffered(1)
            #             on these specs to halve their VMEM footprint on v7x.
            pl.BlockSpec((Cin, Cmid), lambda b, t: (0, 0)),            # w1
            pl.BlockSpec((1, Cmid), lambda b, t: (0, 0)),              # b1
            pl.BlockSpec((3, 3 * Cmid, Cmid), lambda b, t: (0, 0, 0)),  # w2
            pl.BlockSpec((1, Cmid), lambda b, t: (0, 0)),              # b2
            pl.BlockSpec((Cmid, Cout), lambda b, t: (0, 0)),           # w3
            pl.BlockSpec((1, Cout), lambda b, t: (0, 0)),              # b3
        ],
        out_specs=pl.BlockSpec((None, TH * W, Cout), lambda b, t: (b, t, 0)),
        scratch_shapes=[
            pltpu.VMEM((TH + 2, W, 3 * Cmid), jnp.bfloat16),  # width im2col of h1
        ],
    )

    est = _vmem_estimate(TH, W, Cin, Cmid, Cout)
    vmem_limit = int(min(48 * 1024 * 1024, max(16 * 1024 * 1024, 2 * est)))

    out = pl.pallas_call(
        kernel,
        out_shape=jax.ShapeDtypeStruct((N, H * W, Cout), jnp.float32),
        grid_spec=grid_spec,
        compiler_params=pltpu.CompilerParams(
            dimension_semantics=("parallel", "parallel"),
            vmem_limit_bytes=vmem_limit,
        ),
    )(x_flat, x_flat, x_flat, w1k, b1k, w2k, b2k, w3k, b3k)

    out = out.reshape(N, H, W, Cout)
    return jnp.transpose(out, (0, 3, 1, 2))                   # back to NCHW


# --------------------------- parameter construction -------------------------

def make_params(key, in_channel, out_channel, expansion=4):
    Cmid = out_channel
    Cout = out_channel * expansion
    ks = jax.random.split(key, 15)

    # PyTorch-style OIHW conv weights, deterministic.
    w1_oihw = 0.1 * jax.random.normal(ks[0], (Cmid, in_channel, 1, 1), jnp.float32)
    w2_oihw = 0.1 * jax.random.normal(ks[1], (Cmid, Cmid, 3, 3), jnp.float32)
    w3_oihw = 0.1 * jax.random.normal(ks[2], (Cout, Cmid, 1, 1), jnp.float32)

    def bn_params(kg, kb, km, kv, c):
        gamma = 1.0 + 0.1 * jax.random.normal(kg, (c,), jnp.float32)
        beta = 0.1 * jax.random.normal(kb, (c,), jnp.float32)
        mean = 0.1 * jax.random.normal(km, (c,), jnp.float32)
        var = jax.random.uniform(kv, (c,), jnp.float32, 0.5, 1.5)
        return gamma, beta, mean, var

    bn1 = bn_params(ks[3], ks[4], ks[5], ks[6], Cmid)
    bn2 = bn_params(ks[7], ks[8], ks[9], ks[10], Cmid)
    bn3 = bn_params(ks[11], ks[12], ks[13], ks[14], Cout)

    def fold(gamma, beta, mean, var):
        scale = gamma / jnp.sqrt(var + EPS)
        bias = beta - mean * scale
        return scale, bias

    s1, b1 = fold(*bn1)
    s2, b2 = fold(*bn2)
    s3, b3 = fold(*bn3)

    # One-time transform to kernel layout: BN (inference) scales folded into
    # the conv weights, matmul operands pre-cast to bf16.
    w1k = (jnp.transpose(w1_oihw[:, :, 0, 0], (1, 0)) * s1[None, :]
           ).astype(jnp.bfloat16)                                    # (Cin, Cmid)
    w2_hwio = jnp.transpose(w2_oihw, (2, 3, 1, 0))                   # (3,3,Ci,Co)
    w2k = (w2_hwio * s2[None, None, None, :]
           ).reshape(3, 3 * Cmid, Cmid).astype(jnp.bfloat16)         # (3,3*Ci,Co)
    w3k = (jnp.transpose(w3_oihw[:, :, 0, 0], (1, 0)) * s3[None, :]
           ).astype(jnp.bfloat16)                                    # (Cmid, Cout)

    return {
        # kernel-layout tensors
        "w1k": w1k, "b1k": b1.reshape(1, -1),
        "w2k": w2k, "b2k": b2.reshape(1, -1),
        "w3k": w3k, "b3k": b3.reshape(1, -1),
        # original OIHW weights + raw BN params for the reference
        "_w1_oihw": w1_oihw, "_w2_oihw": w2_oihw, "_w3_oihw": w3_oihw,
        "_bn1": bn1, "_bn2": bn2, "_bn3": bn3,
    }


# ------------------------------ pure-JAX reference --------------------------

def bottleneck_reference(x, params, stride=1):
    dn = ("NCHW", "OIHW", "NCHW")

    def bn(y, p):
        g, b, m, v = p
        g = g[None, :, None, None]
        b = b[None, :, None, None]
        m = m[None, :, None, None]
        v = v[None, :, None, None]
        return g * (y - m) / jnp.sqrt(v + EPS) + b

    identity = x
    out = lax.conv_general_dilated(x, params["_w1_oihw"], (1, 1), "VALID",
                                   dimension_numbers=dn)
    out = jax.nn.relu(bn(out, params["_bn1"]))
    out = lax.conv_general_dilated(out, params["_w2_oihw"], (stride, stride),
                                   [(1, 1), (1, 1)], dimension_numbers=dn)
    out = jax.nn.relu(bn(out, params["_bn2"]))
    out = lax.conv_general_dilated(out, params["_w3_oihw"], (1, 1), "VALID",
                                   dimension_numbers=dn)
    out = bn(out, params["_bn3"])
    return jax.nn.relu(out + identity)


# ----------------------------------- main ------------------------------------

if __name__ == "__main__":
    key = jax.random.PRNGKey(0)
    k_x, k_p = jax.random.split(key)

    N, in_channel, H, W = 2, 64, 16, 16
    out_channel = 16                      # expansion=4 -> Cout = 64 == in_channel
    stride = 1                            # downsample=None path

    x = jax.random.normal(k_x, (N, in_channel, H, W), jnp.float32)
    params = make_params(k_p, in_channel, out_channel)

    y_ref = jax.block_until_ready(bottleneck_reference(x, params, stride=stride))

    # row_tile=32 -> full-image band (TH=16, 1 band); row_tile=8 -> 2 bands,
    # exercising the in-kernel top/bottom halo handling.
    for rt in (32, 8):
        y = bottleneck_forward(x, params, stride=stride, row_tile=rt)
        y = jax.block_until_ready(y)
        assert y.shape == y_ref.shape, (y.shape, y_ref.shape)
        max_err = float(jnp.max(jnp.abs(y - y_ref)))
        # bf16 activations/weights (f32 accumulation) vs f32 reference.
        assert jnp.allclose(y, y_ref, atol=5e-2, rtol=5e-2), (rt, max_err)

    print("KERNEL_OK")
</pallas_src>

<mosaic_0001>
module attributes {stable_mosaic.version = 11 : i64} {
  func.func @_bottleneck_kernel(%arg0: i32, %arg1: i32, %arg2: memref<1x16x64xbf16, #tpu.memory_space<vmem>>, %arg3: memref<1x256x64xbf16, #tpu.memory_space<vmem>>, %arg4: memref<1x16x64xbf16, #tpu.memory_space<vmem>>, %arg5: memref<64x16xbf16, #tpu.memory_space<vmem>>, %arg6: memref<1x16xf32, #tpu.memory_space<vmem>>, %arg7: memref<3x48x16xbf16, #tpu.memory_space<vmem>>, %arg8: memref<1x16xf32, #tpu.memory_space<vmem>>, %arg9: memref<16x64xbf16, #tpu.memory_space<vmem>>, %arg10: memref<1x64xf32, #tpu.memory_space<vmem>>, %arg11: memref<1x256x64xf32, #tpu.memory_space<vmem>>, %arg12: memref<18x16x48xbf16, #tpu.memory_space<vmem>>) attributes {dimension_semantics = [#tpu.dimension_semantics<parallel>, #tpu.dimension_semantics<parallel>], iteration_bounds = array<i64: 2, 1>, scalar_prefetch = 0 : i64, scratch_operands = 1 : i64, tpu.core_type = #tpu.core_type<tc>, window_params = [{transform_indices = @transform_0, window_bounds = array<i64: 1, 16, 64>}, {transform_indices = @transform_1, window_bounds = array<i64: 1, 256, 64>}, {transform_indices = @transform_2, window_bounds = array<i64: 1, 16, 64>}, {pipeline_mode = #tpu.pipeline_mode<synchronous>, transform_indices = @transform_3, window_bounds = array<i64: 64, 16>}, {pipeline_mode = #tpu.pipeline_mode<synchronous>, transform_indices = @transform_4, window_bounds = array<i64: 1, 16>}, {pipeline_mode = #tpu.pipeline_mode<synchronous>, transform_indices = @transform_5, window_bounds = array<i64: 3, 48, 16>}, {pipeline_mode = #tpu.pipeline_mode<synchronous>, transform_indices = @transform_6, window_bounds = array<i64: 1, 16>}, {pipeline_mode = #tpu.pipeline_mode<synchronous>, transform_indices = @transform_7, window_bounds = array<i64: 16, 64>}, {pipeline_mode = #tpu.pipeline_mode<synchronous>, transform_indices = @transform_8, window_bounds = array<i64: 1, 64>}, {transform_indices = @transform_9, window_bounds = array<i64: 1, 256, 64>}]} {
    %c0 = arith.constant 0 : index
    %c0_0 = arith.constant 0 : index
    %0 = vector.load %arg5[%c0, %c0_0] : memref<64x16xbf16, #tpu.memory_space<vmem>>, vector<64x16xbf16>
    %c0_1 = arith.constant 0 : index
    %c0_2 = arith.constant 0 : index
    %1 = vector.load %arg6[%c0_1, %c0_2] : memref<1x16xf32, #tpu.memory_space<vmem>>, vector<1x16xf32>
    %c0_3 = arith.constant 0 : index
    %c0_4 = arith.constant 0 : index
    %c0_5 = arith.constant 0 : index
    %2 = vector.load %arg3[%c0_3, %c0_4, %c0_5] : memref<1x256x64xbf16, #tpu.memory_space<vmem>>, vector<1x256x64xbf16>
    %3 = vector.shape_cast %2 : vector<1x256x64xbf16> to vector<256x64xbf16>
    %cst = arith.constant dense<0.000000e+00> : vector<256x16xf32>
    %4 = tpu.matmul %3, %0, %cst {dimension_numbers = #tpu.dot_dimension_numbers<[1], [0], [0], [1], [0, 0, 1, 1], [], []>} : vector<256x64xbf16>, vector<64x16xbf16>, vector<256x16xf32> -> vector<256x16xf32>
    %5 = vector.broadcast %1 : vector<1x16xf32> to vector<256x16xf32>
    %6 = arith.addf %4, %5 : vector<256x16xf32>
    %cst_6 = arith.constant 0.000000e+00 : f32
    %7 = vector.broadcast %cst_6 : f32 to vector<256x16xf32>
    %8 = arith.maximumf %6, %7 : vector<256x16xf32>
    %true = arith.constant true
    %cst_7 = arith.constant 0.000000e+00 : f32
    %9 = vector.broadcast %cst_7 : f32 to vector<256x16xf32>
    %10 = arith.select %true, %8, %9 : vector<256x16xf32>
    %11 = arith.truncf %10 : vector<256x16xf32> to vector<256x16xbf16>
    %12 = vector.shape_cast %11 : vector<256x16xbf16> to vector<16x16x16xbf16>
    %c1 = arith.constant 1 : index
    %c0_8 = arith.constant 0 : index
    %c16 = arith.constant 16 : index
    %13 = vector.load %arg12[%c1, %c0_8, %c16] : memref<18x16x48xbf16, #tpu.memory_space<vmem>>, vector<16x16x16xbf16>
    tpu.vector_store %arg12[%c1, %c0_8, %c16], %12 {strides = array<i32>} : memref<18x16x48xbf16, #tpu.memory_space<vmem>>, vector<16x16x16xbf16>,
    %14 = vector.extract_strided_slice %12 {offsets = [0, 0, 0], sizes = [16, 15, 16], strides = [1, 1, 1]} : vector<16x16x16xbf16> to vector<16x15x16xbf16>
    %c1_9 = arith.constant 1 : index
    %c1_10 = arith.constant 1 : index
    %c0_11 = arith.constant 0 : index
    %15 = vector.load %arg12[%c1_9, %c1_10, %c0_11] : memref<18x16x48xbf16, #tpu.memory_space<vmem>>, vector<16x15x16xbf16>
    tpu.vector_store %arg12[%c1_9, %c1_10, %c0_11], %14 {strides = array<i32>} : memref<18x16x48xbf16, #tpu.memory_space<vmem>>, vector<16x15x16xbf16>,
    %16 = vector.extract_strided_slice %12 {offsets = [0, 1, 0], sizes = [16, 15, 16], strides = [1, 1, 1]} : vector<16x16x16xbf16> to vector<16x15x16xbf16>
    %c1_12 = arith.constant 1 : index
    %c0_13 = arith.constant 0 : index
    %c32 = arith.constant 32 : index
    %17 = vector.load %arg12[%c1_12, %c0_13, %c32] : memref<18x16x48xbf16, #tpu.memory_space<vmem>>, vector<16x15x16xbf16>
    tpu.vector_store %arg12[%c1_12, %c0_13, %c32], %16 {strides = array<i32>} : memref<18x16x48xbf16, #tpu.memory_space<vmem>>, vector<16x15x16xbf16>,
    %c0_14 = arith.constant 0 : index
    %c0_15 = arith.constant 0 : index
    %c0_16 = arith.constant 0 : index
    %18 = vector.load %arg2[%c0_14, %c0_15, %c0_16] : memref<1x16x64xbf16, #tpu.memory_space<vmem>>, vector<1x16x64xbf16>
    %19 = vector.shape_cast %18 : vector<1x16x64xbf16> to vector<16x64xbf16>
    %c0_i32 = arith.constant 0 : i32
    %20 = arith.cmpi sgt, %arg1, %c0_i32 : i32
    %cst_17 = arith.constant dense<0.000000e+00> : vector<16x16xf32>
    %21 = tpu.matmul %19, %0, %cst_17 {dimension_numbers = #tpu.dot_dimension_numbers<[1], [0], [0], [1], [0, 0, 1, 1], [], []>} : vector<16x64xbf16>, vector<64x16xbf16>, vector<16x16xf32> -> vector<16x16xf32>
    %22 = vector.broadcast %1 : vector<1x16xf32> to vector<16x16xf32>
    %23 = arith.addf %21, %22 : vector<16x16xf32>
    %cst_18 = arith.constant 0.000000e+00 : f32
    %24 = vector.broadcast %cst_18 : f32 to vector<16x16xf32>
    %25 = arith.maximumf %23, %24 : vector<16x16xf32>
    %cst_19 = arith.constant 0.000000e+00 : f32
    %26 = vector.broadcast %cst_19 : f32 to vector<16x16xf32>
    %27 = arith.select %20, %25, %26 : vector<16x16xf32>
    %28 = arith.truncf %27 : vector<16x16xf32> to vector<16x16xbf16>
    %29 = vector.shape_cast %28 : vector<16x16xbf16> to vector<1x16x16xbf16>
    %c0_20 = arith.constant 0 : index
    %c0_21 = arith.constant 0 : index
    %c16_22 = arith.constant 16 : index
    %30 = vector.load %arg12[%c0_20, %c0_21, %c16_22] : memref<18x16x48xbf16, #tpu.memory_space<vmem>>, vector<1x16x16xbf16>
    tpu.vector_store %arg12[%c0_20, %c0_21, %c16_22], %29 {strides = array<i32>} : memref<18x16x48xbf16, #tpu.memory_space<vmem>>, vector<1x16x16xbf16>,
    %31 = vector.extract_strided_slice %29 {offsets = [0, 0, 0], sizes = [1, 15, 16], strides = [1, 1, 1]} : vector<1x16x16xbf16> to vector<1x15x16xbf16>
    %c0_23 = arith.constant 0 : index
    %c1_24 = arith.constant 1 : index
    %c0_25 = arith.constant 0 : index
    %32 = vector.load %arg12[%c0_23, %c1_24, %c0_25] : memref<18x16x48xbf16, #tpu.memory_space<vmem>>, vector<1x15x16xbf16>
    tpu.vector_store %arg12[%c0_23, %c1_24, %c0_25], %31 {strides = array<i32>} : memref<18x16x48xbf16, #tpu.memory_space<vmem>>, vector<1x15x16xbf16>,
    %33 = vector.extract_strided_slice %29 {offsets = [0, 1, 0], sizes = [1, 15, 16], strides = [1, 1, 1]} : vector<1x16x16xbf16> to vector<1x15x16xbf16>
    %c0_26 = arith.constant 0 : index
    %c0_27 = arith.constant 0 : index
    %c32_28 = arith.constant 32 : index
    %34 = vector.load %arg12[%c0_26, %c0_27, %c32_28] : memref<18x16x48xbf16, #tpu.memory_space<vmem>>, vector<1x15x16xbf16>
    tpu.vector_store %arg12[%c0_26, %c0_27, %c32_28], %33 {strides = array<i32>} : memref<18x16x48xbf16, #tpu.memory_space<vmem>>, vector<1x15x16xbf16>,
    %c0_29 = arith.constant 0 : index
    %c0_30 = arith.constant 0 : index
    %c0_31 = arith.constant 0 : index
    %35 = vector.load %arg4[%c0_29, %c0_30, %c0_31] : memref<1x16x64xbf16, #tpu.memory_space<vmem>>, vector<1x16x64xbf16>
    %36 = vector.shape_cast %35 : vector<1x16x64xbf16> to vector<16x64xbf16>
    %c0_i32_32 = arith.constant 0 : i32
    %37 = arith.cmpi slt, %arg1, %c0_i32_32 : i32
    %cst_33 = arith.constant dense<0.000000e+00> : vector<16x16xf32>
    %38 = tpu.matmul %36, %0, %cst_33 {dimension_numbers = #tpu.dot_dimension_numbers<[1], [0], [0], [1], [0, 0, 1, 1], [], []>} : vector<16x64xbf16>, vector<64x16xbf16>, vector<16x16xf32> -> vector<16x16xf32>
    %39 = vector.broadcast %1 : vector<1x16xf32> to vector<16x16xf32>
    %40 = arith.addf %38, %39 : vector<16x16xf32>
    %cst_34 = arith.constant 0.000000e+00 : f32
    %41 = vector.broadcast %cst_34 : f32 to vector<16x16xf32>
    %42 = arith.maximumf %40, %41 : vector<16x16xf32>
    %cst_35 = arith.constant 0.000000e+00 : f32
    %43 = vector.broadcast %cst_35 : f32 to vector<16x16xf32>
    %44 = arith.select %37, %42, %43 : vector<16x16xf32>
    %45 = arith.truncf %44 : vector<16x16xf32> to vector<16x16xbf16>
    %46 = vector.shape_cast %45 : vector<16x16xbf16> to vector<1x16x16xbf16>
    %c17 = arith.constant 17 : index
    %c0_36 = arith.constant 0 : index
    %c16_37 = arith.constant 16 : index
    %47 = vector.load %arg12[%c17, %c0_36, %c16_37] : memref<18x16x48xbf16, #tpu.memory_space<vmem>>, vector<1x16x16xbf16>
    tpu.vector_store %arg12[%c17, %c0_36, %c16_37], %46 {strides = array<i32>} : memref<18x16x48xbf16, #tpu.memory_space<vmem>>, vector<1x16x16xbf16>,
    %48 = vector.extract_strided_slice %46 {offsets = [0, 0, 0], sizes = [1, 15, 16], strides = [1, 1, 1]} : vector<1x16x16xbf16> to vector<1x15x16xbf16>
    %c17_38 = arith.constant 17 : index
    %c1_39 = arith.constant 1 : index
    %c0_40 = arith.constant 0 : index
    %49 = vector.load %arg12[%c17_38, %c1_39, %c0_40] : memref<18x16x48xbf16, #tpu.memory_space<vmem>>, vector<1x15x16xbf16>
    tpu.vector_store %arg12[%c17_38, %c1_39, %c0_40], %48 {strides = array<i32>} : memref<18x16x48xbf16, #tpu.memory_space<vmem>>, vector<1x15x16xbf16>,
    %50 = vector.extract_strided_slice %46 {offsets = [0, 1, 0], sizes = [1, 15, 16], strides = [1, 1, 1]} : vector<1x16x16xbf16> to vector<1x15x16xbf16>
    %c17_41 = arith.constant 17 : index
    %c0_42 = arith.constant 0 : index
    %c32_43 = arith.constant 32 : index
    %51 = vector.load %arg12[%c17_41, %c0_42, %c32_43] : memref<18x16x48xbf16, #tpu.memory_space<vmem>>, vector<1x15x16xbf16>
    tpu.vector_store %arg12[%c17_41, %c0_42, %c32_43], %50 {strides = array<i32>} : memref<18x16x48xbf16, #tpu.memory_space<vmem>>, vector<1x15x16xbf16>,
    %cst_44 = arith.constant 0.000000e+00 : bf16
    %52 = vector.broadcast %cst_44 : bf16 to vector<18x1x16xbf16>
    %c0_45 = arith.constant 0 : index
    %c0_46 = arith.constant 0 : index
    %c0_47 = arith.constant 0 : index
    %53 = vector.load %arg12[%c0_45, %c0_46, %c0_47] : memref<18x16x48xbf16, #tpu.memory_space<vmem>>, vector<18x1x16xbf16>
    tpu.vector_store %arg12[%c0_45, %c0_46, %c0_47], %52 {strides = array<i32>} : memref<18x16x48xbf16, #tpu.memory_space<vmem>>, vector<18x1x16xbf16>,
    %c0_48 = arith.constant 0 : index
    %c15 = arith.constant 15 : index
    %c32_49 = arith.constant 32 : index
    %54 = vector.load %arg12[%c0_48, %c15, %c32_49] : memref<18x16x48xbf16, #tpu.memory_space<vmem>>, vector<18x1x16xbf16>
    tpu.vector_store %arg12[%c0_48, %c15, %c32_49], %52 {strides = array<i32>} : memref<18x16x48xbf16, #tpu.memory_space<vmem>>, vector<18x1x16xbf16>,
    %c0_50 = arith.constant 0 : index
    %c0_51 = arith.constant 0 : index
    %c0_52 = arith.constant 0 : index
    %55 = vector.load %arg12[%c0_50, %c0_51, %c0_52] : memref<18x16x48xbf16, #tpu.memory_space<vmem>>, vector<16x16x48xbf16>
    %56 = vector.shape_cast %55 : vector<16x16x48xbf16> to vector<256x48xbf16>
    %c0_53 = arith.constant 0 : index
    %c0_54 = arith.constant 0 : index
    %c0_55 = arith.constant 0 : index
    %57 = vector.load %arg7[%c0_53, %c0_54, %c0_55] : memref<3x48x16xbf16, #tpu.memory_space<vmem>>, vector<1x48x16xbf16>
    %58 = vector.shape_cast %57 : vector<1x48x16xbf16> to vector<48x16xbf16>
    %cst_56 = arith.constant dense<0.000000e+00> : vector<256x16xf32>
    %59 = tpu.matmul %56, %58, %cst_56 {dimension_numbers = #tpu.dot_dimension_numbers<[1], [0], [0], [1], [0, 0, 1, 1], [], []>} : vector<256x48xbf16>, vector<48x16xbf16>, vector<256x16xf32> -> vector<256x16xf32>
    %c1_57 = arith.constant 1 : index
    %c0_58 = arith.constant 0 : index
    %c0_59 = arith.constant 0 : index
    %60 = vector.load %arg12[%c1_57, %c0_58, %c0_59] : memref<18x16x48xbf16, #tpu.memory_space<vmem>>, vector<16x16x48xbf16>
    %61 = vector.shape_cast %60 : vector<16x16x48xbf16> to vector<256x48xbf16>
    %c1_60 = arith.constant 1 : index
    %c0_61 = arith.constant 0 : index
    %c0_62 = arith.constant 0 : index
    %62 = vector.load %arg7[%c1_60, %c0_61, %c0_62] : memref<3x48x16xbf16, #tpu.memory_space<vmem>>, vector<1x48x16xbf16>
    %63 = vector.shape_cast %62 : vector<1x48x16xbf16> to vector<48x16xbf16>
    %cst_63 = arith.constant dense<0.000000e+00> : vector<256x16xf32>
    %64 = tpu.matmul %61, %63, %cst_63 {dimension_numbers = #tpu.dot_dimension_numbers<[1], [0], [0], [1], [0, 0, 1, 1], [], []>} : vector<256x48xbf16>, vector<48x16xbf16>, vector<256x16xf32> -> vector<256x16xf32>
    %65 = arith.addf %59, %64 : vector<256x16xf32>
    %c2 = arith.constant 2 : index
    %c0_64 = arith.constant 0 : index
    %c0_65 = arith.constant 0 : index
    %66 = vector.load %arg12[%c2, %c0_64, %c0_65] : memref<18x16x48xbf16, #tpu.memory_space<vmem>>, vector<16x16x48xbf16>
    %67 = vector.shape_cast %66 : vector<16x16x48xbf16> to vector<256x48xbf16>
    %c2_66 = arith.constant 2 : index
    %c0_67 = arith.constant 0 : index
    %c0_68 = arith.constant 0 : index
    %68 = vector.load %arg7[%c2_66, %c0_67, %c0_68] : memref<3x48x16xbf16, #tpu.memory_space<vmem>>, vector<1x48x16xbf16>
    %69 = vector.shape_cast %68 : vector<1x48x16xbf16> to vector<48x16xbf16>
    %cst_69 = arith.constant dense<0.000000e+00> : vector<256x16xf32>
    %70 = tpu.matmul %67, %69, %cst_69 {dimension_numbers = #tpu.dot_dimension_numbers<[1], [0], [0], [1], [0, 0, 1, 1], [], []>} : vector<256x48xbf16>, vector<48x16xbf16>, vector<256x16xf32> -> vector<256x16xf32>
    %71 = arith.addf %65, %70 : vector<256x16xf32>
    %c0_70 = arith.constant 0 : index
    %c0_71 = arith.constant 0 : index
    %72 = vector.load %arg8[%c0_70, %c0_71] : memref<1x16xf32, #tpu.memory_space<vmem>>, vector<1x16xf32>
    %73 = vector.broadcast %72 : vector<1x16xf32> to vector<256x16xf32>
    %74 = arith.addf %71, %73 : vector<256x16xf32>
    %cst_72 = arith.constant 0.000000e+00 : f32
    %75 = vector.broadcast %cst_72 : f32 to vector<256x16xf32>
    %76 = arith.maximumf %74, %75 : vector<256x16xf32>
    %77 = arith.truncf %76 : vector<256x16xf32> to vector<256x16xbf16>
    %c0_73 = arith.constant 0 : index
    %c0_74 = arith.constant 0 : index
    %78 = vector.load %arg9[%c0_73, %c0_74] : memref<16x64xbf16, #tpu.memory_space<vmem>>, vector<16x64xbf16>
    %cst_75 = arith.constant dense<0.000000e+00> : vector<256x64xf32>
    %79 = tpu.matmul %77, %78, %cst_75 {dimension_numbers = #tpu.dot_dimension_numbers<[1], [0], [0], [1], [0, 0, 1, 1], [], []>} : vector<256x16xbf16>, vector<16x64xbf16>, vector<256x64xf32> -> vector<256x64xf32>
    %c0_76 = arith.constant 0 : index
    %c0_77 = arith.constant 0 : index
    %80 = vector.load %arg10[%c0_76, %c0_77] : memref<1x64xf32, #tpu.memory_space<vmem>>, vector<1x64xf32>
    %81 = vector.broadcast %80 : vector<1x64xf32> to vector<256x64xf32>
    %82 = arith.addf %79, %81 : vector<256x64xf32>
    %c0_78 = arith.constant 0 : index
    %c0_79 = arith.constant 0 : index
    %c0_80 = arith.constant 0 : index
    %83 = vector.load %arg3[%c0_78, %c0_79, %c0_80] : memref<1x256x64xbf16, #tpu.memory_space<vmem>>, vector<1x256x64xbf16>
    %84 = vector.shape_cast %83 : vector<1x256x64xbf16> to vector<256x64xbf16>
    %85 = arith.extf %84 : vector<256x64xbf16> to vector<256x64xf32>
    %86 = arith.addf %82, %85 : vector<256x64xf32>
    %cst_81 = arith.constant 0.000000e+00 : f32
    %87 = vector.broadcast %cst_81 : f32 to vector<256x64xf32>
    %88 = arith.maximumf %86, %87 : vector<256x64xf32>
    %c0_82 = arith.constant 0 : index
    %c0_83 = arith.constant 0 : index
    %c0_84 = arith.constant 0 : index
    %89 = vector.load %arg11[%c0_82, %c0_83, %c0_84] : memref<1x256x64xf32, #tpu.memory_space<vmem>>, vector<1x256x64xf32>
    %90 = vector.shape_cast %89 : vector<1x256x64xf32> to vector<256x64xf32>
    %91 = vector.shape_cast %88 : vector<256x64xf32> to vector<1x256x64xf32>
    tpu.vector_store %arg11[%c0_82, %c0_83, %c0_84], %91 {strides = array<i32>} : memref<1x256x64xf32, #tpu.memory_space<vmem>>, vector<1x256x64xf32>,
    return
  }
  func.func @transform_0(%arg0: i32, %arg1: i32) -> (i32, i32, i32) {
    %c16_i32 = arith.constant 16 : i32
    %0 = arith.muli %arg1, %c16_i32 : i32
    %c1_i32 = arith.constant 1 : i32
    %1 = arith.subi %0, %c1_i32 : i32
    %c0_i32 = arith.constant 0 : i32
    %2 = arith.maxsi %1, %c0_i32 : i32
    %c0_i32_0 = arith.constant 0 : i32
    %c0_i32_1 = arith.constant 0 : i32
    return %arg0, %2, %c0_i32_0 : i32, i32, i32
  }
  func.func @transform_1(%arg0: i32, %arg1: i32) -> (i32, i32, i32) {
    %c0_i32 = arith.constant 0 : i32
    %c0_i32_0 = arith.constant 0 : i32
    return %arg0, %arg1, %c0_i32 : i32, i32, i32
  }
  func.func @transform_2(%arg0: i32, %arg1: i32) -> (i32, i32, i32) {
    %c16_i32 = arith.constant 16 : i32
    %0 = arith.muli %arg1, %c16_i32 : i32
    %c16_i32_0 = arith.constant 16 : i32
    %1 = arith.addi %0, %c16_i32_0 : i32
    %c15_i32 = arith.constant 15 : i32
    %2 = arith.minsi %1, %c15_i32 : i32
    %c0_i32 = arith.constant 0 : i32
    %c0_i32_1 = arith.constant 0 : i32
    return %arg0, %2, %c0_i32 : i32, i32, i32
  }
  func.func @transform_3(%arg0: i32, %arg1: i32) -> (i32, i32) {
    %c0_i32 = arith.constant 0 : i32
    %c0_i32_0 = arith.constant 0 : i32
    %c0_i32_1 = arith.constant 0 : i32
    return %c0_i32, %c0_i32_0 : i32, i32
  }
  func.func @transform_4(%arg0: i32, %arg1: i32) -> (i32, i32) {
    %c0_i32 = arith.constant 0 : i32
    %c0_i32_0 = arith.constant 0 : i32
    %c0_i32_1 = arith.constant 0 : i32
    return %c0_i32, %c0_i32_0 : i32, i32
  }
  func.func @transform_5(%arg0: i32, %arg1: i32) -> (i32, i32, i32) {
    %c0_i32 = arith.constant 0 : i32
    %c0_i32_0 = arith.constant 0 : i32
    %c0_i32_1 = arith.constant 0 : i32
    %c0_i32_2 = arith.constant 0 : i32
    return %c0_i32, %c0_i32_0, %c0_i32_1 : i32, i32, i32
  }
  func.func @transform_6(%arg0: i32, %arg1: i32) -> (i32, i32) {
    %c0_i32 = arith.constant 0 : i32
    %c0_i32_0 = arith.constant 0 : i32
    %c0_i32_1 = arith.constant 0 : i32
    return %c0_i32, %c0_i32_0 : i32, i32
  }
  func.func @transform_7(%arg0: i32, %arg1: i32) -> (i32, i32) {
    %c0_i32 = arith.constant 0 : i32
    %c0_i32_0 = arith.constant 0 : i32
    %c0_i32_1 = arith.constant 0 : i32
    return %c0_i32, %c0_i32_0 : i32, i32
  }
  func.func @transform_8(%arg0: i32, %arg1: i32) -> (i32, i32) {
    %c0_i32 = arith.constant 0 : i32
    %c0_i32_0 = arith.constant 0 : i32
    %c0_i32_1 = arith.constant 0 : i32
    return %c0_i32, %c0_i32_0 : i32, i32
  }
  func.func @transform_9(%arg0: i32, %arg1: i32) -> (i32, i32, i32) {
    %c0_i32 = arith.constant 0 : i32
    %c0_i32_0 = arith.constant 0 : i32
    return %arg0, %arg1, %c0_i32 : i32, i32, i32
  }
}

</mosaic_0001>

<llo_original>
// kernel: tpu_custom_call.1
$region0: #{tpu_custom_call.1}
  #allocation0 [shape = 'u32[]', space=smem, size = 0x4, offset = 0x4, fixed_abs, tag = 'smem constant byte address 0x4 - core index']
  #allocation1 [shape = 'u32[144,128]{1,0:T(1,128)}', space=vmem, size = 0x12000, scoped, tag = 'internal scratch']
  #allocation2 [shape = 'bf16[18,16,48]{2,1,0:T(16,128)(2,1)}', space=vmem, size = 0x12000, scoped, tag = 'scratch operand']
  %s0 = inlined_call_operand.vmem [shape: bf16[2,256,64], index: 0, kind: input, shape index: {}]
  %s1 = inlined_call_operand.vmem [shape: bf16[2,256,64], index: 1, kind: input, shape index: {}]
  %s2 = inlined_call_operand.vmem [shape: bf16[2,256,64], index: 2, kind: input, shape index: {}]
  %s3 = inlined_call_operand.vmem [shape: bf16[64,16], index: 3, kind: input, shape index: {}]
  %s4 = inlined_call_operand.vmem [shape: f32[1,16], index: 4, kind: input, shape index: {}]
  %s5 = inlined_call_operand.vmem [shape: bf16[3,48,16], index: 5, kind: input, shape index: {}]
  %s6 = inlined_call_operand.vmem [shape: f32[1,16], index: 6, kind: input, shape index: {}]
  %s7 = inlined_call_operand.vmem [shape: bf16[16,64], index: 7, kind: input, shape index: {}]
  %s8 = inlined_call_operand.vmem [shape: f32[1,64], index: 8, kind: input, shape index: {}]
  %s9 = inlined_call_operand.vmem [shape: f32[2,256,64], index: 9, kind: output, shape index: {}]
  %s10 = sld [smem:[#allocation0]]
  $region69: #{tpu_custom_call.1} parent=0
    _
  %s12 = ssub.s32 1, %s10
  %s13 = scalar_select 0, %s12, %s10
  loop: start=0, step=1, limit=4
  $region2: #{tpu_custom_call.1} parent=0 // loop_pre_header
    _
  $region3: #{tpu_custom_call.1} parent=0 // loop_header
    %s15 = sphi 0, %s19
    %p16 = scmp.ge.s32.totalorder %s15, 4
    %s22 = sphi 0, %s34
    %s23 = sphi 0, %s30
    %s24 = sphi 0, %s22
    %s25 = sphi 0, %s23
    %s26 = sphi 0, %s24
    %s27 = sphi 0, %s25
    %s47 = sphi 0, %s49
    %s50 = sphi 0, %s47
    %s51 = sphi 0, %s50
    %s67 = sphi 0, %s51
    %s75 = sphi 0, %s77
    %s78 = sphi 0, %s75
    %s79 = sphi 0, %s78
    %s95 = sphi 0, %s79
    %s111 = sphi 0, %s113
    %s114 = sphi 0, %s111
    %s115 = sphi 0, %s114
    %s131 = sphi 0, %s115
    %s135 = sphi 0, %s135
    %s137 = sphi 0, %s135
    %s138 = sphi 0, %s137
    %s152 = sphi 0, %s138
    %s156 = sphi 0, %s156
    %s158 = sphi 0, %s156
    %s159 = sphi 0, %s158
    %s173 = sphi 0, %s159
    %s177 = sphi 0, %s177
    %s179 = sphi 0, %s177
    %s180 = sphi 0, %s179
    %s194 = sphi 0, %s180
    %s198 = sphi 0, %s198
    %s200 = sphi 0, %s198
    %s201 = sphi 0, %s200
    %s215 = sphi 0, %s201
    %s219 = sphi 0, %s219
    %s221 = sphi 0, %s219
    %s222 = sphi 0, %s221
    %s236 = sphi 0, %s222
    %s240 = sphi 0, %s240
    %s242 = sphi 0, %s240
    %s243 = sphi 0, %s242
    %s257 = sphi 0, %s243
    %s265 = sphi 0, %s267
    %s268 = sphi 0, %s265
    %s269 = sphi 0, %s268
    %s285 = sphi 0, %s269
  $region4: #{tpu_custom_call.1} parent=0 // loop_header_branch
    %18 = sbr.rel (%p16) target = $region8
  $region5: #{tpu_custom_call.1} parent=0 // loop_body
    %s20 = ssub.s32 %s15, 1
    %s21 = ssub.s32 %s15, 2
    %s28 = sadd.s32 1, %s23
    %p29 = scmp.ge.s32.totalorder %s28, 1
    %s30 = scalar_select %p29, 0, %s28
    %s31 = sadd.s32 1, %s22
    %s32 = scalar_select %p29, %s31, %s22
    %p33 = scmp.ge.s32.totalorder %s32, 2
    %s34 = scalar_select %p33, 0, %s32
    %s35 = smul.u32 %s23, 16
    %s36 = ssub.s32 %s35, 1
    %p37 = scmp.gt.s32.totalorder %s36, 0
    %s38 = scalar_select %p37, %s36, 0
    %s39 = smul.u32 %s30, 16
    %s40 = ssub.s32 %s39, 1
    %p41 = scmp.gt.s32.totalorder %s40, 0
    %s42 = scalar_select %p41, %s40, 0
    %s43 = ssub.s32 %s22, %s34
    %s44 = ssub.s32 %s38, %s42
    %s45 = sor.u32 %s43, %s44
    %p46 = scmp.eq.s32.totalorder %s45, 0
    %s48 = sadd.s32 %s47, 1
    %s49 = scalar_select %p46, %s47, %s48
    %p52 = pneg %p46
    %p53 = scmp.eq.s32.totalorder %s15, 1
    %p54 = por %p52, %p53
    %p55 = scmp.ne.s32.totalorder %s47, %s50
    %p56 = scmp.eq.s32.totalorder %s15, 0
    %p57 = por %p55, %p56
    %p58 = scmp.ne.s32.totalorder %s47, %s50
    %p59 = scmp.eq.s32.totalorder %s20, 1
    %p60 = por %p58, %p59
    %p61 = scmp.ne.s32.totalorder %s50, %s51
    %p62 = scmp.eq.s32.totalorder %s20, 0
    %p63 = por %p61, %p62
    %p64 = scmp.ne.s32.totalorder %s50, %s51
    %p65 = scmp.eq.s32.totalorder %s21, 1
    %p66 = por %p64, %p65
    %p68 = scmp.ne.s32.totalorder %s51, %s67
    %p69 = scmp.eq.s32.totalorder %s21, 0
    %p70 = por %p68, %p69
    %s71 = ssub.s32 %s22, %s34
    %s72 = ssub.s32 %s23, %s30
    %s73 = sor.u32 %s71, %s72
    %p74 = scmp.eq.s32.totalorder %s73, 0
    %s76 = sadd.s32 %s75, 1
    %s77 = scalar_select %p74, %s75, %s76
    %p80 = pneg %p74
    %p81 = scmp.eq.s32.totalorder %s15, 1
    %p82 = por %p80, %p81
    %p83 = scmp.ne.s32.totalorder %s75, %s78
    %p84 = scmp.eq.s32.totalorder %s15, 0
    %p85 = por %p83, %p84
    %p86 = scmp.ne.s32.totalorder %s75, %s78
    %p87 = scmp.eq.s32.totalorder %s20, 1
    %p88 = por %p86, %p87
    %p89 = scmp.ne.s32.totalorder %s78, %s79
    %p90 = scmp.eq.s32.totalorder %s20, 0
    %p91 = por %p89, %p90
    %p92 = scmp.ne.s32.totalorder %s78, %s79
    %p93 = scmp.eq.s32.totalorder %s21, 1
    %p94 = por %p92, %p93
    %p96 = scmp.ne.s32.totalorder %s79, %s95
    %p97 = scmp.eq.s32.totalorder %s21, 0
    %p98 = por %p96, %p97
    %s99 = smul.u32 %s23, 16
    %s100 = sadd.s32 %s99, 16
    %p101 = scmp.lt.s32.totalorder %s100, 15
    %s102 = scalar_select %p101, %s100, 15
    %s103 = smul.u32 %s30, 16
    %s104 = sadd.s32 %s103, 16
    %p105 = scmp.lt.s32.totalorder %s104, 15
    %s106 = scalar_select %p105, %s104, 15
    %s107 = ssub.s32 %s22, %s34
    %s108 = ssub.s32 %s102, %s106
    %s109 = sor.u32 %s107, %s108
    %p110 = scmp.eq.s32.totalorder %s109, 0
    %s112 = sadd.s32 %s111, 1
    %s113 = scalar_select %p110, %s111, %s112
    %p116 = pneg %p110
    %p117 = scmp.eq.s32.totalorder %s15, 1
    %p118 = por %p116, %p117
    %p119 = scmp.ne.s32.totalorder %s111, %s114
    %p120 = scmp.eq.s32.totalorder %s15, 0
    %p121 = por %p119, %p120
    %p122 = scmp.ne.s32.totalorder %s111, %s114
    %p123 = scmp.eq.s32.totalorder %s20, 1
    %p124 = por %p122, %p123
    %p125 = scmp.ne.s32.totalorder %s114, %s115
    %p126 = scmp.eq.s32.totalorder %s20, 0
    %p127 = por %p125, %p126
    %p128 = scmp.ne.s32.totalorder %s114, %s115
    %p129 = scmp.eq.s32.totalorder %s21, 1
    %p130 = por %p128, %p129
    %p132 = scmp.ne.s32.totalorder %s115, %s131
    %p133 = scmp.eq.s32.totalorder %s21, 0
    %p134 = por %p132, %p133
    %s136 = sadd.s32 %s135, 1
    %p139 = scmp.eq.s32.totalorder %s15, 1
    %p140 = scmp.ne.s32.totalorder %s135, %s137
    %p141 = scmp.eq.s32.totalorder %s15, 0
    %p142 = por %p140, %p141
    %p143 = scmp.ne.s32.totalorder %s135, %s137
    %p144 = scmp.eq.s32.totalorder %s20, 1
    %p145 = por %p143, %p144
    %p146 = scmp.ne.s32.totalorder %s137, %s138
    %p147 = scmp.eq.s32.totalorder %s20, 0
    %p148 = por %p146, %p147
    %p149 = scmp.ne.s32.totalorder %s137, %s138
    %p150 = scmp.eq.s32.totalorder %s21, 1
    %p151 = por %p149, %p150
    %p153 = scmp.ne.s32.totalorder %s138, %s152
    %p154 = scmp.eq.s32.totalorder %s21, 0
    %p155 = por %p153, %p154
    %s157 = sadd.s32 %s156, 1
    %p160 = scmp.eq.s32.totalorder %s15, 1
    %p161 = scmp.ne.s32.totalorder %s156, %s158
    %p162 = scmp.eq.s32.totalorder %s15, 0
    %p163 = por %p161, %p162
    %p164 = scmp.ne.s32.totalorder %s156, %s158
    %p165 = scmp.eq.s32.totalorder %s20, 1
    %p166 = por %p164, %p165
    %p167 = scmp.ne.s32.totalorder %s158, %s159
    %p168 = scmp.eq.s32.totalorder %s20, 0
    %p169 = por %p167, %p168
    %p170 = scmp.ne.s32.totalorder %s158, %s159
    %p171 = scmp.eq.s32.totalorder %s21, 1
    %p172 = por %p170, %p171
    %p174 = scmp.ne.s32.totalorder %s159, %s173
    %p175 = scmp.eq.s32.totalorder %s21, 0
    %p176 = por %p174, %p175
    %s178 = sadd.s32 %s177, 1
    %p181 = scmp.eq.s32.totalorder %s15, 1
    %p182 = scmp.ne.s32.totalorder %s177, %s179
    %p183 = scmp.eq.s32.totalorder %s15, 0
    %p184 = por %p182, %p183
    %p185 = scmp.ne.s32.totalorder %s177, %s179
    %p186 = scmp.eq.s32.totalorder %s20, 1
    %p187 = por %p185, %p186
    %p188 = scmp.ne.s32.totalorder %s179, %s180
    %p189 = scmp.eq.s32.totalorder %s20, 0
    %p190 = por %p188, %p189
    %p191 = scmp.ne.s32.totalorder %s179, %s180
    %p192 = scmp.eq.s32.totalorder %s21, 1
    %p193 = por %p191, %p192
    %p195 = scmp.ne.s32.totalorder %s180, %s194
    %p196 = scmp.eq.s32.totalorder %s21, 0
    %p197 = por %p195, %p196
    %s199 = sadd.s32 %s198, 1
    %p202 = scmp.eq.s32.totalorder %s15, 1
    %p203 = scmp.ne.s32.totalorder %s198, %s200
    %p204 = scmp.eq.s32.totalorder %s15, 0
    %p205 = por %p203, %p204
    %p206 = scmp.ne.s32.totalorder %s198, %s200
    %p207 = scmp.eq.s32.totalorder %s20, 1
    %p208 = por %p206, %p207
    %p209 = scmp.ne.s32.totalorder %s200, %s201
    %p210 = scmp.eq.s32.totalorder %s20, 0
    %p211 = por %p209, %p210
    %p212 = scmp.ne.s32.totalorder %s200, %s201
    %p213 = scmp.eq.s32.totalorder %s21, 1
    %p214 = por %p212, %p213
    %p216 = scmp.ne.s32.totalorder %s201, %s215
    %p217 = scmp.eq.s32.totalorder %s21, 0
    %p218 = por %p216, %p217
    %s220 = sadd.s32 %s219, 1
    %p223 = scmp.eq.s32.totalorder %s15, 1
    %p224 = scmp.ne.s32.totalorder %s219, %s221
    %p225 = scmp.eq.s32.totalorder %s15, 0
    %p226 = por %p224, %p225
    %p227 = scmp.ne.s32.totalorder %s219, %s221
    %p228 = scmp.eq.s32.totalorder %s20, 1
    %p229 = por %p227, %p228
    %p230 = scmp.ne.s32.totalorder %s221, %s222
    %p231 = scmp.eq.s32.totalorder %s20, 0
    %p232 = por %p230, %p231
    %p233 = scmp.ne.s32.totalorder %s221, %s222
    %p234 = scmp.eq.s32.totalorder %s21, 1
    %p235 = por %p233, %p234
    %p237 = scmp.ne.s32.totalorder %s222, %s236
    %p238 = scmp.eq.s32.totalorder %s21, 0
    %p239 = por %p237, %p238
    %s241 = sadd.s32 %s240, 1
    %p244 = scmp.eq.s32.totalorder %s15, 1
    %p245 = scmp.ne.s32.totalorder %s240, %s242
    %p246 = scmp.eq.s32.totalorder %s15, 0
    %p247 = por %p245, %p246
    %p248 = scmp.ne.s32.totalorder %s240, %s242
    %p249 = scmp.eq.s32.totalorder %s20, 1
    %p250 = por %p248, %p249
    %p251 = scmp.ne.s32.totalorder %s242, %s243
    %p252 = scmp.eq.s32.totalorder %s20, 0
    %p253 = por %p251, %p252
    %p254 = scmp.ne.s32.totalorder %s242, %s243
    %p255 = scmp.eq.s32.totalorder %s21, 1
    %p256 = por %p254, %p255
    %p258 = scmp.ne.s32.totalorder %s243, %s257
    %p259 = scmp.eq.s32.totalorder %s21, 0
    %p260 = por %p258, %p259
    %s261 = ssub.s32 %s22, %s34
    %s262 = ssub.s32 %s23, %s30
    %s263 = sor.u32 %s261, %s262
    %p264 = scmp.eq.s32.totalorder %s263, 0
    %s266 = sadd.s32 %s265, 1
    %s267 = scalar_select %p264, %s265, %s266
    %p270 = pneg %p264
    %p271 = scmp.eq.s32.totalorder %s15, 1
    %p272 = por %p270, %p271
    %p273 = scmp.ne.s32.totalorder %s265, %s268
    %p274 = scmp.eq.s32.totalorder %s15, 0
    %p275 = por %p273, %p274
    %p276 = scmp.ne.s32.totalorder %s265, %s268
    %p277 = scmp.eq.s32.totalorder %s20, 1
    %p278 = por %p276, %p277
    %p279 = scmp.ne.s32.totalorder %s268, %s269
    %p280 = scmp.eq.s32.totalorder %s20, 0
    %p281 = por %p279, %p280
    %p282 = scmp.ne.s32.totalorder %s268, %s269
    %p283 = scmp.eq.s32.totalorder %s21, 1
    %p284 = por %p282, %p283
    %p286 = scmp.ne.s32.totalorder %s269, %s285
    %p287 = scmp.eq.s32.totalorder %s21, 0
    %p288 = por %p286, %p287
    %p289 = scmp.le.s32.totalorder 1, %s15
    %p290 = scmp.lt.s32.totalorder %s15, 3
    %p291 = pnand %p289, %p290
    %p292 = pneg %p291
    // Predicated region
    $region9: #{tpu_custom_call.1} parent=5 // pred_check
      _
    $region10: #{tpu_custom_call.1} parent=5 // pred_check_branch
      %294 = sbr.rel (%p291) target = $region12
    $region11: #{tpu_custom_call.1} parent=5 // pred_region
      %s295 = ssub.s32 %s15, 1
      // Predicated region
      $region13: #{tpu_custom_call.1} parent=11 // pred_check
        %p296 = pneg %p148
      $region14: #{tpu_custom_call.1} parent=11 // pred_check_branch
        %298 = sbr.rel (%p296) target = $region16
      $region15: #{tpu_custom_call.1} parent=11 // pred_region
        _
      $region16: #{tpu_custom_call.1} parent=11 // pred_fallthru
        _
      // Predicated region
      $region17: #{tpu_custom_call.1} parent=11 // pred_check
        %p299 = pneg %p169
      $region18: #{tpu_custom_call.1} parent=11 // pred_check_branch
        %301 = sbr.rel (%p299) target = $region20
      $region19: #{tpu_custom_call.1} parent=11 // pred_region
        _
      $region20: #{tpu_custom_call.1} parent=11 // pred_fallthru
        _
      // Predicated region
      $region21: #{tpu_custom_call.1} parent=11 // pred_check
        %p302 = pneg %p190
      $region22: #{tpu_custom_call.1} parent=11 // pred_check_branch
        %304 = sbr.rel (%p302) target = $region24
      $region23: #{tpu_custom_call.1} parent=11 // pred_region
        _
      $region24: #{tpu_custom_call.1} parent=11 // pred_fallthru
        _
      // Predicated region
      $region25: #{tpu_custom_call.1} parent=11 // pred_check
        %p305 = pneg %p211
      $region26: #{tpu_custom_call.1} parent=11 // pred_check_branch
        %307 = sbr.rel (%p305) target = $region28
      $region27: #{tpu_custom_call.1} parent=11 // pred_region
        _
      $region28: #{tpu_custom_call.1} parent=11 // pred_fallthru
        _
      // Predicated region
      $region29: #{tpu_custom_call.1} parent=11 // pred_check
        %p308 = pneg %p232
      $region30: #{tpu_custom_call.1} parent=11 // pred_check_branch
        %310 = sbr.rel (%p308) target = $region32
      $region31: #{tpu_custom_call.1} parent=11 // pred_region
        _
      $region32: #{tpu_custom_call.1} parent=11 // pred_fallthru
        _
      // Predicated region
      $region33: #{tpu_custom_call.1} parent=11 // pred_check
        %p311 = pneg %p253
      $region34: #{tpu_custom_call.1} parent=11 // pred_check_branch
        %313 = sbr.rel (%p311) target = $region36
      $region35: #{tpu_custom_call.1} parent=11 // pred_region
        _
      $region36: #{tpu_custom_call.1} parent=11 // pred_fallthru
        _
    $region12: #{tpu_custom_call.1} parent=5 // pred_fallthru
      _
    %p314 = scmp.lt.s32.totalorder %s15, 2
    // Predicated region
    $region37: #{tpu_custom_call.1} parent=5 // pred_check
      %p315 = pneg %p314
    $region38: #{tpu_custom_call.1} parent=5 // pred_check_branch
      %317 = sbr.rel (%p315) target = $region40
    $region39: #{tpu_custom_call.1} parent=5 // pred_region
      // Predicated region
      $region41: #{tpu_custom_call.1} parent=39 // pred_check
        %p318 = pneg %p57
      $region42: #{tpu_custom_call.1} parent=39 // pred_check_branch
        %320 = sbr.rel (%p318) target = $region44
      $region43: #{tpu_custom_call.1} parent=39 // pred_region
        %s321 = smul.u32 %s23, 16
        %s322 = ssub.s32 %s321, 1
        %p323 = scmp.gt.s32.totalorder %s322, 0
        %s324 = scalar_select %p323, %s322, 0
        %s325 = smul.u32 2, %s324
        %p326 = scmp.lt.s32.totalorder %s22, 1
        %s327 = scalar_select %p326, %s22, 1
        %p328 = scmp.lt.s32.totalorder %s325, 31
        %s329 = scalar_select %p328, %s325, 31
        %s330 = smul.addr %s327, 32
        %s331 = sadd.s32 %s329, %s330
        %s332 = smul.addr %s331, 4
        %s333 = scalar_lea.vmem %s0, %s332
        %s334 = smul.u32 %s23, 16
        %s335 = ssub.s32 %s334, 1
        %p336 = scmp.gt.s32.totalorder %s335, 0
        %s337 = scalar_select %p336, %s335, 0
        %s338 = smul.u32 2, %s337
      $region44: #{tpu_custom_call.1} parent=39 // pred_fallthru
        _
      // Predicated region
      $region45: #{tpu_custom_call.1} parent=39 // pred_check
        %p339 = pneg %p85
      $region46: #{tpu_custom_call.1} parent=39 // pred_check_branch
        %341 = sbr.rel (%p339) target = $region48
      $region47: #{tpu_custom_call.1} parent=39 // pred_region
        %s342 = smul.u32 32, %s23
        %p343 = scmp.lt.s32.totalorder %s22, 1
        %s344 = scalar_select %p343, %s22, 1
        %p345 = scmp.lt.s32.totalorder %s342, 31
        %s346 = scalar_select %p345, %s342, 31
        %s347 = smul.addr %s344, 32
        %s348 = sadd.s32 %s346, %s347
        %s349 = smul.addr %s348, 4
        %s350 = scalar_lea.vmem %s1, %s349
        %s351 = smul.u32 32, %s23
      $region48: #{tpu_custom_call.1} parent=39 // pred_fallthru
        _
      // Predicated region
      $region49: #{tpu_custom_call.1} parent=39 // pred_check
        %p352 = pneg %p121
      $region50: #{tpu_custom_call.1} parent=39 // pred_check_branch
        %354 = sbr.rel (%p352) target = $region52
      $region51: #{tpu_custom_call.1} parent=39 // pred_region
        %s355 = smul.u32 %s23, 16
        %s356 = sadd.s32 %s355, 16
        %p357 = scmp.lt.s32.totalorder %s356, 15
        %s358 = scalar_select %p357, %s356, 15
        %s359 = smul.u32 2, %s358
        %p360 = scmp.lt.s32.totalorder %s22, 1
        %s361 = scalar_select %p360, %s22, 1
        %p362 = scmp.lt.s32.totalorder %s359, 31
        %s363 = scalar_select %p362, %s359, 31
        %s364 = smul.addr %s361, 32
        %s365 = sadd.s32 %s363, %s364
        %s366 = smul.addr %s365, 4
        %s367 = scalar_lea.vmem %s2, %s366
        %s368 = smul.u32 %s23, 16
        %s369 = sadd.s32 %s368, 16
        %p370 = scmp.lt.s32.totalorder %s369, 15
        %s371 = scalar_select %p370, %s369, 15
        %s372 = smul.u32 2, %s371
      $region52: #{tpu_custom_call.1} parent=39 // pred_fallthru
        _
    $region40: #{tpu_custom_call.1} parent=5 // pred_fallthru
      _
    %p373 = scmp.le.s32.totalorder 1, %s15
    %p374 = scmp.lt.s32.totalorder %s15, 3
    %p375 = pnand %p373, %p374
    %p376 = pneg %p375
    // Predicated region
    $region53: #{tpu_custom_call.1} parent=5 // pred_check
      _
    $region54: #{tpu_custom_call.1} parent=5 // pred_check_branch
      %378 = sbr.rel (%p375) target = $region56
    $region55: #{tpu_custom_call.1} parent=5 // pred_region
      %s379 = ssub.s32 %s15, 1
      %s380 = smul.u32 %s25, 16
      %s381 = ssub.s32 %s380, 1
      %p382 = scmp.gt.s32.totalorder %s381, 0
      %s383 = scalar_select %p382, %s381, 0
      %s384 = smul.u32 2, %s383
      %p385 = scmp.lt.s32.totalorder %s24, 1
      %s386 = scalar_select %p385, %s24, 1
      %p387 = scmp.lt.s32.totalorder %s384, 31
      %s388 = scalar_select %p387, %s384, 31
      %s389 = smul.addr %s386, 32
      %s390 = sadd.s32 %s388, %s389
      %s391 = smul.addr %s390, 4
      %s392 = scalar_lea.vmem %s0, %s391
      %p393 = pneg %p63
      %p394 = pneg %p60
      %s395 = smul.u32 32, %s25
      %p396 = scmp.lt.s32.totalorder %s24, 1
      %s397 = scalar_select %p396, %s24, 1
      %p398 = scmp.lt.s32.totalorder %s395, 31
      %s399 = scalar_select %p398, %s395, 31
      %s400 = smul.addr %s397, 32
      %s401 = sadd.s32 %s399, %s400
      %s402 = smul.addr %s401, 4
      %s403 = scalar_lea.vmem %s1, %s402
      %p404 = pneg %p91
      %p405 = pneg %p88
      %s406 = smul.u32 %s25, 16
      %s407 = sadd.s32 %s406, 16
      %p408 = scmp.lt.s32.totalorder %s407, 15
      %s409 = scalar_select %p408, %s407, 15
      %s410 = smul.u32 2, %s409
      %p411 = scmp.lt.s32.totalorder %s24, 1
      %s412 = scalar_select %p411, %s24, 1
      %p413 = scmp.lt.s32.totalorder %s410, 31
      %s414 = scalar_select %p413, %s410, 31
      %s415 = smul.addr %s412, 32
      %s416 = sadd.s32 %s414, %s415
      %s417 = smul.addr %s416, 4
      %s418 = scalar_lea.vmem %s2, %s417
      %p419 = pneg %p127
      %p420 = pneg %p124
      %p421 = pneg %p148
      %p422 = pneg %p145
      %p423 = pneg %p169
      %p424 = pneg %p166
      %p425 = pneg %p190
      %p426 = pneg %p187
      %p427 = pneg %p211
      %p428 = pneg %p208
      %p429 = pneg %p232
      %p430 = pneg %p229
      %p431 = pneg %p253
      %p432 = pneg %p250
      %p433 = pneg %p281
      %p434 = pneg %p278
      %s435 = smul.u32 32, %s25
      %p436 = scmp.lt.s32.totalorder %s24, 1
      %s437 = scalar_select %p436, %s24, 1
      %p438 = scmp.lt.s32.totalorder %s435, 31
      %s439 = scalar_select %p438, %s435, 31
      %s440 = smul.addr %s437, 32
      %s441 = sadd.s32 %s439, %s440
      %s442 = smul.addr %s441, 8
      %s443 = scalar_lea.vmem %s9, %s442
      %s444 = smul.u32 %s25, 16
      %s445 = ssub.s32 %s444, 1
      %p446 = scmp.gt.s32.totalorder %s445, 0
      %s447 = scalar_select %p446, %s445, 0
      %s448 = smul.u32 2, %s447
      %p449 = scmp.lt.s32.totalorder %s24, 1
      %s450 = scalar_select %p449, %s24, 1
      %p451 = scmp.lt.s32.totalorder %s448, 31
      %s452 = scalar_select %p451, %s448, 31
      %s453 = smul.addr %s450, 32
      %s454 = sadd.s32 %s452, %s453
      %s455 = smul.addr %s454, 4
      %s456 = scalar_lea.vmem %s0, %s455
      %s457 = smul.u32 %s25, 16
      %s458 = ssub.s32 %s457, 1
      %p459 = scmp.gt.s32.totalorder %s458, 0
      %s460 = scalar_select %p459, %s458, 0
      %s461 = smul.u32 2, %s460
      %s462 = smul.u32 32, %s25
      %p463 = scmp.lt.s32.totalorder %s24, 1
      %s464 = scalar_select %p463, %s24, 1
      %p465 = scmp.lt.s32.totalorder %s462, 31
      %s466 = scalar_select %p465, %s462, 31
      %s467 = smul.addr %s464, 32
      %s468 = sadd.s32 %s466, %s467
      %s469 = smul.addr %s468, 4
      %s470 = scalar_lea.vmem %s1, %s469
      %s471 = smul.u32 32, %s25
      %s472 = smul.u32 %s25, 16
      %s473 = sadd.s32 %s472, 16
      %p474 = scmp.lt.s32.totalorder %s473, 15
      %s475 = scalar_select %p474, %s473, 15
      %s476 = smul.u32 2, %s475
      %p477 = scmp.lt.s32.totalorder %s24, 1
      %s478 = scalar_select %p477, %s24, 1
      %p479 = scmp.lt.s32.totalorder %s476, 31
      %s480 = scalar_select %p479, %s476, 31
      %s481 = smul.addr %s478, 32
      %s482 = sadd.s32 %s480, %s481
      %s483 = smul.addr %s482, 4
      %s484 = scalar_lea.vmem %s2, %s483
      %s485 = smul.u32 %s25, 16
      %s486 = sadd.s32 %s485, 16
      %p487 = scmp.lt.s32.totalorder %s486, 15
      %s488 = scalar_select %p487, %s486, 15
      %s489 = smul.u32 2, %s488
      %s490 = smul.u32 32, %s25
      %p491 = scmp.lt.s32.totalorder %s24, 1
      %s492 = scalar_select %p491, %s24, 1
      %p493 = scmp.lt.s32.totalorder %s490, 31
      %s494 = scalar_select %p493, %s490, 31
      %s495 = smul.addr %s492, 32
      %s496 = sadd.s32 %s494, %s495
      %s497 = smul.addr %s496, 8
      %s498 = scalar_lea.vmem %s9, %s497
      %s499 = smul.u32 32, %s25
      %v501 = vld [vmem:[%s3] sm:$0xf]
      %v502 = vld [vmem:[%s3 + $0x4] sm:$0xf]
      %v503 = vld [vmem:[%s3 + $0x8] sm:$0xf]
      %v504 = vld [vmem:[%s3 + $0xc] sm:$0xf]
      %v505 = vld [vmem:[%s3 + $0x10] sm:$0xf]
      %v506 = vld [vmem:[%s3 + $0x14] sm:$0xf]
      %v507 = vld [vmem:[%s3 + $0x18] sm:$0xf]
      %v508 = vld [vmem:[%s3 + $0x1c] sm:$0xf]
      %v509 = vld [vmem:[%s4] sm:$0x1]
      %v510 = vld [vmem:[%s470] sm:$0xf]
      %v511 = vld [vmem:[%s470 + $0x4] sm:$0xf]
      %v512 = vld [vmem:[%s470 + $0x8] sm:$0xf]
      %v513 = vld [vmem:[%s470 + $0xc] sm:$0xf]
      %v514 = vld [vmem:[%s470 + $0x10] sm:$0xf]
      %v515 = vld [vmem:[%s470 + $0x14] sm:$0xf]
      %v516 = vld [vmem:[%s470 + $0x18] sm:$0xf]
      %v517 = vld [vmem:[%s470 + $0x1c] sm:$0xf]
      %v518 = vld [vmem:[%s470 + $0x20] sm:$0xf]
      %v519 = vld [vmem:[%s470 + $0x24] sm:$0xf]
      %v520 = vld [vmem:[%s470 + $0x28] sm:$0xf]
      %v521 = vld [vmem:[%s470 + $0x2c] sm:$0xf]
      %v522 = vld [vmem:[%s470 + $0x30] sm:$0xf]
      %v523 = vld [vmem:[%s470 + $0x34] sm:$0xf]
      %v524 = vld [vmem:[%s470 + $0x38] sm:$0xf]
      %v525 = vld [vmem:[%s470 + $0x3c] sm:$0xf]
      %v526 = vld [vmem:[%s470 + $0x40] sm:$0xf]
      %v527 = vld [vmem:[%s470 + $0x44] sm:$0xf]
      %v528 = vld [vmem:[%s470 + $0x48] sm:$0xf]
      %v529 = vld [vmem:[%s470 + $0x4c] sm:$0xf]
      %v530 = vld [vmem:[%s470 + $0x50] sm:$0xf]
      %v531 = vld [vmem:[%s470 + $0x54] sm:$0xf]
      %v532 = vld [vmem:[%s470 + $0x58] sm:$0xf]
      %v533 = vld [vmem:[%s470 + $0x5c] sm:$0xf]
      %v534 = vld [vmem:[%s470 + $0x60] sm:$0xf]
      %v535 = vld [vmem:[%s470 + $0x64] sm:$0xf]
      %v536 = vld [vmem:[%s470 + $0x68] sm:$0xf]
      %v537 = vld [vmem:[%s470 + $0x6c] sm:$0xf]
      %v538 = vld [vmem:[%s470 + $0x70] sm:$0xf]
      %v539 = vld [vmem:[%s470 + $0x74] sm:$0xf]
      %v540 = vld [vmem:[%s470 + $0x78] sm:$0xf]
      %v541 = vld [vmem:[%s470 + $0x7c] sm:$0xf]
      %v543 = vlaneseq
      %v544 = vshrl.u32 %v543, 7
      %v545 = vsub.s32 0, %v544
      %v546 = vrot.slane %v509, %v545
      %v580 = vunpack.c.l.b16 %v510
      %v581 = vunpack.c.l.b16 %v511
      %v582 = vunpack.c.l.b16 %v512
      %v583 = vunpack.c.l.b16 %v513
      %v584 = vunpack.c.l.b16 %v514
      %v585 = vunpack.c.l.b16 %v515
      %v586 = vunpack.c.l.b16 %v516
      %v587 = vunpack.c.l.b16 %v517
      %v588 = vunpack.c.l.b16 %v518
      %v589 = vunpack.c.l.b16 %v519
      %v590 = vunpack.c.l.b16 %v520
      %v591 = vunpack.c.l.b16 %v521
      %v592 = vunpack.c.l.b16 %v522
      %v593 = vunpack.c.l.b16 %v523
      %v594 = vunpack.c.l.b16 %v524
      %v595 = vunpack.c.l.b16 %v525
      %v596 = vunpack.c.l.b16 %v526
      %v597 = vunpack.c.l.b16 %v527
      %v598 = vunpack.c.l.b16 %v528
      %v599 = vunpack.c.l.b16 %v529
      %v600 = vunpack.c.l.b16 %v530
      %v601 = vunpack.c.l.b16 %v531
      %v602 = vunpack.c.l.b16 %v532
      %v603 = vunpack.c.l.b16 %v533
      %v604 = vunpack.c.l.b16 %v534
      %v605 = vunpack.c.l.b16 %v535
      %v606 = vunpack.c.l.b16 %v536
      %v607 = vunpack.c.l.b16 %v537
      %v608 = vunpack.c.l.b16 %v538
      %v609 = vunpack.c.l.b16 %v539
      %v610 = vunpack.c.l.b16 %v540
      %v611 = vunpack.c.l.b16 %v541
      %v612 = vpack.c.b16 %v581, %v580
      %v613 = vpack.c.b16 %v583, %v582
      %v614 = vpack.c.b16 %v585, %v584
      %v615 = vpack.c.b16 %v587, %v586
      %v616 = vpack.c.b16 %v589, %v588
      %v617 = vpack.c.b16 %v591, %v590
      %v618 = vpack.c.b16 %v593, %v592
      %v619 = vpack.c.b16 %v595, %v594
      %v620 = vpack.c.b16 %v597, %v596
      %v621 = vpack.c.b16 %v599, %v598
      %v622 = vpack.c.b16 %v601, %v600
      %v623 = vpack.c.b16 %v603, %v602
      %v624 = vpack.c.b16 %v605, %v604
      %v625 = vpack.c.b16 %v607, %v606
      %v626 = vpack.c.b16 %v609, %v608
      %v627 = vpack.c.b16 %v611, %v610
      %v636 = vunpack.c.l.b16 %v501
      %v637 = vunpack.c.l.b16 %v502
      %v638 = vunpack.c.l.b16 %v503
      %v639 = vunpack.c.l.b16 %v504
      %v640 = vunpack.c.l.b16 %v505
      %v641 = vunpack.c.l.b16 %v506
      %v642 = vunpack.c.l.b16 %v507
      %v643 = vunpack.c.l.b16 %v508
      %v644 = vpack.c.b16 %v637, %v636
      %v645 = vpack.c.b16 %v639, %v638
      %v646 = vpack.c.b16 %v641, %v640
      %v647 = vpack.c.b16 %v643, %v642
      %vm652 = vcmask 523264
      %v654 = vsel %vm652, %v612, 0
      %v657 = vsel %vm652, %v613, 0
      %v660 = vsel %vm652, %v614, 0
      %v663 = vsel %vm652, %v615, 0
      %v666 = vsel %vm652, %v616, 0
      %v669 = vsel %vm652, %v617, 0
      %v672 = vsel %vm652, %v618, 0
      %v675 = vsel %vm652, %v619, 0
      %v678 = vsel %vm652, %v620, 0
      %v681 = vsel %vm652, %v621, 0
      %v684 = vsel %vm652, %v622, 0
      %v687 = vsel %vm652, %v623, 0
      %v690 = vsel %vm652, %v624, 0
      %v693 = vsel %vm652, %v625, 0
      %v696 = vsel %vm652, %v626, 0
      %v699 = vsel %vm652, %v627, 0
      %701 = vmatprep.subr.bf16.mxu0 0
      %702 = vmatpush1.bf16.msra.mxu0 %v644
      %703 = vmatprep.subr.bf16.mxu0 0
      %704 = vmatpush1.bf16.msra.mxu0 %v645
      %705 = vmatprep.subr.bf16.mxu0 0
      %706 = vmatpush1.bf16.msra.mxu0 %v646
      %707 = vmatprep.subr.bf16.mxu0 0
      %708 = vmatpush1.bf16.msra.mxu0 %v647
      %709 = vmatprep.subr.bf16.mxu0 0
      %710 = vmatpush1.bf16.msra.mxu0 0
      %711 = vmatprep.subr.bf16.mxu0 0
      %712 = vmatpush1.bf16.msra.mxu0 0
      %713 = vmatprep.subr.bf16.mxu0 0
      %714 = vmatpush1.bf16.msra.mxu0 0
      %715 = vmatprep.subr.bf16.mxu0 0
      %716 = vmatpush1.bf16.msra.mxu0 0
      %717 = vmatprep.subr.bf16.mxu0 0
      %718 = vmatpush1.bf16.msra.mxu0 0
      %719 = vmatprep.subr.bf16.mxu0 0
      %720 = vmatpush1.bf16.msra.mxu0 0
      %721 = vmatprep.subr.bf16.mxu0 0
      %722 = vmatpush1.bf16.msra.mxu0 0
      %723 = vmatprep.subr.bf16.mxu0 0
      %724 = vmatpush1.bf16.msra.mxu0 0
      %725 = vmatprep.subr.bf16.mxu0 0
      %726 = vmatpush1.bf16.msra.mxu0 0
      %727 = vmatprep.subr.bf16.mxu0 0
      %728 = vmatpush1.bf16.msra.mxu0 0
      %729 = vmatprep.subr.bf16.mxu0 0
      %730 = vmatpush1.bf16.msra.mxu0 0
      %731 = vmatprep.subr.bf16.mxu0 0
      %732 = vmatpush1.bf16.msra.mxu0 0
      %733 = vmatprep.mubr.bf16.mxu0 0
      %734 = vmatmul.mubr.bf16.gmra.mrb[0].mxu0 %v654
      %v735 = vpop.f32.mrb[0].mxu0
      %v736 = vadd.f32 %v546, %v735
      %v737 = vpop.f32.mrb[0].mxu0
      %v738 = vpop.f32.mrb[0].mxu0
      %v739 = vadd.f32 %v546, %v738
      %v740 = vpop.f32.mrb[0].mxu0
      %741 = vmatprep.mubr.bf16.mxu0 0
      %742 = vmatmul.mubr.bf16.gmra.mrb[0].mxu0 %v657
      %v743 = vpop.f32.mrb[0].mxu0
      %v744 = vadd.f32 %v546, %v743
      %v745 = vpop.f32.mrb[0].mxu0
      %v746 = vpop.f32.mrb[0].mxu0
      %v747 = vadd.f32 %v546, %v746
      %v748 = vpop.f32.mrb[0].mxu0
      %749 = vmatprep.mubr.bf16.mxu0 0
      %750 = vmatmul.mubr.bf16.gmra.mrb[0].mxu0 %v660
      %v751 = vpop.f32.mrb[0].mxu0
      %v752 = vadd.f32 %v546, %v751
      %v753 = vpop.f32.mrb[0].mxu0
      %v754 = vpop.f32.mrb[0].mxu0
      %v755 = vadd.f32 %v546, %v754
      %v756 = vpop.f32.mrb[0].mxu0
      %757 = vmatprep.mubr.bf16.mxu0 0
      %758 = vmatmul.mubr.bf16.gmra.mrb[0].mxu0 %v663
      %v759 = vpop.f32.mrb[0].mxu0
      %v760 = vadd.f32 %v546, %v759
      %v761 = vpop.f32.mrb[0].mxu0
      %v762 = vpop.f32.mrb[0].mxu0
      %v763 = vadd.f32 %v546, %v762
      %v764 = vpop.f32.mrb[0].mxu0
      %765 = vmatprep.mubr.bf16.mxu0 0
      %766 = vmatmul.mubr.bf16.gmra.mrb[0].mxu0 %v666
      %v767 = vpop.f32.mrb[0].mxu0
      %v768 = vadd.f32 %v546, %v767
      %v769 = vpop.f32.mrb[0].mxu0
      %v770 = vpop.f32.mrb[0].mxu0
      %v771 = vadd.f32 %v546, %v770
      %v772 = vpop.f32.mrb[0].mxu0
      %773 = vmatprep.mubr.bf16.mxu0 0
      %774 = vmatmul.mubr.bf16.gmra.mrb[0].mxu0 %v669
      %v775 = vpop.f32.mrb[0].mxu0
      %v776 = vadd.f32 %v546, %v775
      %v777 = vpop.f32.mrb[0].mxu0
      %v778 = vpop.f32.mrb[0].mxu0
      %v779 = vadd.f32 %v546, %v778
      %v780 = vpop.f32.mrb[0].mxu0
      %781 = vmatprep.mubr.bf16.mxu0 0
      %782 = vmatmul.mubr.bf16.gmra.mrb[0].mxu0 %v672
      %v783 = vpop.f32.mrb[0].mxu0
      %v784 = vadd.f32 %v546, %v783
      %v785 = vpop.f32.mrb[0].mxu0
      %v786 = vpop.f32.mrb[0].mxu0
      %v787 = vadd.f32 %v546, %v786
      %v788 = vpop.f32.mrb[0].mxu0
      %789 = vmatprep.mubr.bf16.mxu0 0
      %790 = vmatmul.mubr.bf16.gmra.mrb[0].mxu0 %v675
      %v791 = vpop.f32.mrb[0].mxu0
      %v792 = vadd.f32 %v546, %v791
      %v793 = vpop.f32.mrb[0].mxu0
      %v794 = vpop.f32.mrb[0].mxu0
      %v795 = vadd.f32 %v546, %v794
      %v796 = vpop.f32.mrb[0].mxu0
      %797 = vmatprep.mubr.bf16.mxu0 0
      %798 = vmatmul.mubr.bf16.gmra.mrb[0].mxu0 %v678
      %v799 = vpop.f32.mrb[0].mxu0
      %v800 = vadd.f32 %v546, %v799
      %v801 = vpop.f32.mrb[0].mxu0
      %v802 = vpop.f32.mrb[0].mxu0
      %v803 = vadd.f32 %v546, %v802
      %v804 = vpop.f32.mrb[0].mxu0
      %805 = vmatprep.mubr.bf16.mxu0 0
      %806 = vmatmul.mubr.bf16.gmra.mrb[0].mxu0 %v681
      %v807 = vpop.f32.mrb[0].mxu0
      %v808 = vadd.f32 %v546, %v807
      %v809 = vpop.f32.mrb[0].mxu0
      %v810 = vpop.f32.mrb[0].mxu0
      %v811 = vadd.f32 %v546, %v810
      %v812 = vpop.f32.mrb[0].mxu0
      %813 = vmatprep.mubr.bf16.mxu0 0
      %814 = vmatmul.mubr.bf16.gmra.mrb[0].mxu0 %v684
      %v815 = vpop.f32.mrb[0].mxu0
      %v816 = vadd.f32 %v546, %v815
      %v817 = vpop.f32.mrb[0].mxu0
      %v818 = vpop.f32.mrb[0].mxu0
      %v819 = vadd.f32 %v546, %v818
      %v820 = vpop.f32.mrb[0].mxu0
      %821 = vmatprep.mubr.bf16.mxu0 0
      %822 = vmatmul.mubr.bf16.gmra.mrb[0].mxu0 %v687
      %v823 = vpop.f32.mrb[0].mxu0
      %v824 = vadd.f32 %v546, %v823
      %v825 = vpop.f32.mrb[0].mxu0
      %v826 = vpop.f32.mrb[0].mxu0
      %v827 = vadd.f32 %v546, %v826
      %v828 = vpop.f32.mrb[0].mxu0
      %829 = vmatprep.mubr.bf16.mxu0 0
      %830 = vmatmul.mubr.bf16.gmra.mrb[0].mxu0 %v690
      %v831 = vpop.f32.mrb[0].mxu0
      %v832 = vadd.f32 %v546, %v831
      %v833 = vpop.f32.mrb[0].mxu0
      %v834 = vpop.f32.mrb[0].mxu0
      %v835 = vadd.f32 %v546, %v834
      %v836 = vpop.f32.mrb[0].mxu0
      %837 = vmatprep.mubr.bf16.mxu0 0
      %838 = vmatmul.mubr.bf16.gmra.mrb[0].mxu0 %v693
      %v839 = vpop.f32.mrb[0].mxu0
      %v840 = vadd.f32 %v546, %v839
      %v841 = vpop.f32.mrb[0].mxu0
      %v842 = vpop.f32.mrb[0].mxu0
      %v843 = vadd.f32 %v546, %v842
      %v844 = vpop.f32.mrb[0].mxu0
      %845 = vmatprep.mubr.bf16.mxu0 0
      %846 = vmatmul.mubr.bf16.gmra.mrb[0].mxu0 %v696
      %v847 = vpop.f32.mrb[0].mxu0
      %v848 = vadd.f32 %v546, %v847
      %v849 = vpop.f32.mrb[0].mxu0
      %v850 = vpop.f32.mrb[0].mxu0
      %v851 = vadd.f32 %v546, %v850
      %v852 = vpop.f32.mrb[0].mxu0
      %853 = vmatprep.mubr.bf16.mxu0 0
      %854 = vmatmul.mubr.bf16.gmra.mrb[0].mxu0 %v699
      %v855 = vpop.f32.mrb[0].mxu0
      %v856 = vadd.f32 %v546, %v855
      %v857 = vpop.f32.mrb[0].mxu0
      %v858 = vpop.f32.mrb[0].mxu0
      %v859 = vadd.f32 %v546, %v858
      %v860 = vpop.f32.mrb[0].mxu0
      %861 = vdwg.mxu0
      %v862 = vmax.f32 %v736, 0.0
      %v863 = vmax.f32 %v739, 0.0
      %v864 = vmax.f32 %v744, 0.0
      %v865 = vmax.f32 %v747, 0.0
      %v866 = vmax.f32 %v752, 0.0
      %v867 = vmax.f32 %v755, 0.0
      %v868 = vmax.f32 %v760, 0.0
      %v869 = vmax.f32 %v763, 0.0
      %v870 = vmax.f32 %v768, 0.0
      %v871 = vmax.f32 %v771, 0.0
      %v872 = vmax.f32 %v776, 0.0
      %v873 = vmax.f32 %v779, 0.0
      %v874 = vmax.f32 %v784, 0.0
      %v875 = vmax.f32 %v787, 0.0
      %v876 = vmax.f32 %v792, 0.0
      %v877 = vmax.f32 %v795, 0.0
      %v878 = vmax.f32 %v800, 0.0
      %v879 = vmax.f32 %v803, 0.0
      %v880 = vmax.f32 %v808, 0.0
      %v881 = vmax.f32 %v811, 0.0
      %v882 = vmax.f32 %v816, 0.0
      %v883 = vmax.f32 %v819, 0.0
      %v884 = vmax.f32 %v824, 0.0
      %v885 = vmax.f32 %v827, 0.0
      %v886 = vmax.f32 %v832, 0.0
      %v887 = vmax.f32 %v835, 0.0
      %v888 = vmax.f32 %v840, 0.0
      %v889 = vmax.f32 %v843, 0.0
      %v890 = vmax.f32 %v848, 0.0
      %v891 = vmax.f32 %v851, 0.0
      %v892 = vmax.f32 %v856, 0.0
      %v893 = vmax.f32 %v859, 0.0
      %v894 = vpack.c.bf16 %v863, %v862
      %v895 = vpack.c.bf16 %v865, %v864
      %v896 = vpack.c.bf16 %v867, %v866
      %v897 = vpack.c.bf16 %v869, %v868
      %v898 = vpack.c.bf16 %v871, %v870
      %v899 = vpack.c.bf16 %v873, %v872
      %v900 = vpack.c.bf16 %v875, %v874
      %v901 = vpack.c.bf16 %v877, %v876
      %v902 = vpack.c.bf16 %v879, %v878
      %v903 = vpack.c.bf16 %v881, %v880
      %v904 = vpack.c.bf16 %v883, %v882
      %v905 = vpack.c.bf16 %v885, %v884
      %v906 = vpack.c.bf16 %v887, %v886
      %v907 = vpack.c.bf16 %v889, %v888
      %v908 = vpack.c.bf16 %v891, %v890
      %v909 = vpack.c.bf16 %v893, %v892
      %926 = vrot.lane.b32.xlu0 %v894, 16
      %v927 = vpop.permute.xlu0 %926
      %928 = vrot.lane.b32.xlu0 %v895, 16
      %v929 = vpop.permute.xlu0 %928
      %930 = vrot.lane.b32.xlu0 %v896, 16
      %v931 = vpop.permute.xlu0 %930
      %932 = vrot.lane.b32.xlu0 %v897, 16
      %v933 = vpop.permute.xlu0 %932
      %934 = vrot.lane.b32.xlu0 %v898, 16
      %v935 = vpop.permute.xlu0 %934
      %936 = vrot.lane.b32.xlu0 %v899, 16
      %v937 = vpop.permute.xlu0 %936
      %938 = vrot.lane.b32.xlu0 %v900, 16
      %v939 = vpop.permute.xlu0 %938
      %940 = vrot.lane.b32.xlu0 %v901, 16
      %v941 = vpop.permute.xlu0 %940
      %942 = vrot.lane.b32.xlu0 %v902, 16
      %v943 = vpop.permute.xlu0 %942
      %944 = vrot.lane.b32.xlu0 %v903, 16
      %v945 = vpop.permute.xlu0 %944
      %946 = vrot.lane.b32.xlu0 %v904, 16
      %v947 = vpop.permute.xlu0 %946
      %948 = vrot.lane.b32.xlu0 %v905, 16
      %v949 = vpop.permute.xlu0 %948
      %950 = vrot.lane.b32.xlu0 %v906, 16
      %v951 = vpop.permute.xlu0 %950
      %952 = vrot.lane.b32.xlu0 %v907, 16
      %v953 = vpop.permute.xlu0 %952
      %954 = vrot.lane.b32.xlu0 %v908, 16
      %v955 = vpop.permute.xlu0 %954
      %956 = vrot.lane.b32.xlu0 %v909, 16
      %v957 = vpop.permute.xlu0 %956
      %s974 = scalar_lea.vmem [#allocation2], 8
      %vm975 = vcmask 261248
      %976 = vst.msk [vmem:[%s974] sm:$0xff] %vm975, %v927
      %977 = vst.msk [vmem:[%s974 + $0x8] sm:$0xff] %vm975, %v929
      %978 = vst.msk [vmem:[%s974 + $0x10] sm:$0xff] %vm975, %v931
      %979 = vst.msk [vmem:[%s974 + $0x18] sm:$0xff] %vm975, %v933
      %980 = vst.msk [vmem:[%s974 + $0x20] sm:$0xff] %vm975, %v935
      %981 = vst.msk [vmem:[%s974 + $0x28] sm:$0xff] %vm975, %v937
      %982 = vst.msk [vmem:[%s974 + $0x30] sm:$0xff] %vm975, %v939
      %983 = vst.msk [vmem:[%s974 + $0x38] sm:$0xff] %vm975, %v941
      %984 = vst.msk [vmem:[%s974 + $0x40] sm:$0xff] %vm975, %v943
      %985 = vst.msk [vmem:[%s974 + $0x48] sm:$0xff] %vm975, %v945
      %986 = vst.msk [vmem:[%s974 + $0x50] sm:$0xff] %vm975, %v947
      %987 = vst.msk [vmem:[%s974 + $0x58] sm:$0xff] %vm975, %v949
      %988 = vst.msk [vmem:[%s974 + $0x60] sm:$0xff] %vm975, %v951
      %989 = vst.msk [vmem:[%s974 + $0x68] sm:$0xff] %vm975, %v953
      %990 = vst.msk [vmem:[%s974 + $0x70] sm:$0xff] %vm975, %v955
      %991 = vst.msk [vmem:[%s974 + $0x78] sm:$0xff] %vm975, %v957
      %v993 = vshrl.u32 %v894, 16
      %v995 = vrot.slane %v993, 7
      %v996 = vshll.u32 %v894, 16
      %v998 = vor.u32 %v995, %v996
      %v1000 = vshrl.u32 %v895, 16
      %v1002 = vrot.slane %v1000, 7
      %v1003 = vshll.u32 %v895, 16
      %v1005 = vor.u32 %v1002, %v1003
      %v1007 = vshrl.u32 %v896, 16
      %v1009 = vrot.slane %v1007, 7
      %v1010 = vshll.u32 %v896, 16
      %v1012 = vor.u32 %v1009, %v1010
      %v1014 = vshrl.u32 %v897, 16
      %v1016 = vrot.slane %v1014, 7
      %v1017 = vshll.u32 %v897, 16
      %v1019 = vor.u32 %v1016, %v1017
      %v1021 = vshrl.u32 %v898, 16
      %v1023 = vrot.slane %v1021, 7
      %v1024 = vshll.u32 %v898, 16
      %v1026 = vor.u32 %v1023, %v1024
      %v1028 = vshrl.u32 %v899, 16
      %v1030 = vrot.slane %v1028, 7
      %v1031 = vshll.u32 %v899, 16
      %v1033 = vor.u32 %v1030, %v1031
      %v1035 = vshrl.u32 %v900, 16
      %v1037 = vrot.slane %v1035, 7
      %v1038 = vshll.u32 %v900, 16
      %v1040 = vor.u32 %v1037, %v1038
      %v1042 = vshrl.u32 %v901, 16
      %v1044 = vrot.slane %v1042, 7
      %v1045 = vshll.u32 %v901, 16
      %v1047 = vor.u32 %v1044, %v1045
      %v1049 = vshrl.u32 %v902, 16
      %v1051 = vrot.slane %v1049, 7
      %v1052 = vshll.u32 %v902, 16
      %v1054 = vor.u32 %v1051, %v1052
      %v1056 = vshrl.u32 %v903, 16
      %v1058 = vrot.slane %v1056, 7
      %v1059 = vshll.u32 %v903, 16
      %v1061 = vor.u32 %v1058, %v1059
      %v1063 = vshrl.u32 %v904, 16
      %v1065 = vrot.slane %v1063, 7
      %v1066 = vshll.u32 %v904, 16
      %v1068 = vor.u32 %v1065, %v1066
      %v1070 = vshrl.u32 %v905, 16
      %v1072 = vrot.slane %v1070, 7
      %v1073 = vshll.u32 %v905, 16
      %v1075 = vor.u32 %v1072, %v1073
      %v1077 = vshrl.u32 %v906, 16
      %v1079 = vrot.slane %v1077, 7
      %v1080 = vshll.u32 %v906, 16
      %v1082 = vor.u32 %v1079, %v1080
      %v1084 = vshrl.u32 %v907, 16
      %v1086 = vrot.slane %v1084, 7
      %v1087 = vshll.u32 %v907, 16
      %v1089 = vor.u32 %v1086, %v1087
      %v1091 = vshrl.u32 %v908, 16
      %v1093 = vrot.slane %v1091, 7
      %v1094 = vshll.u32 %v908, 16
      %v1096 = vor.u32 %v1093, %v1094
      %v1098 = vshrl.u32 %v909, 16
      %v1100 = vrot.slane %v1098, 7
      %v1101 = vshll.u32 %v909, 16
      %v1103 = vor.u32 %v1100, %v1101
      %vm1120 = vcmask 130048
      %vm1121 = vsmask.f32 7938
      %vm1122 = vmand %vm1120, %vm1121
      %v1123 = vld [vmem:[%s974] sm:$0xff]
      %v1124 = vsel %vm1122, %v998, %v1123
      %1125 = vst [vmem:[%s974] sm:$0xff] %v1124
      %v1126 = vld [vmem:[%s974 + $0x8] sm:$0xff]
      %v1127 = vsel %vm1122, %v1005, %v1126
      %1128 = vst [vmem:[%s974 + $0x8] sm:$0xff] %v1127
      %v1129 = vld [vmem:[%s974 + $0x10] sm:$0xff]
      %v1130 = vsel %vm1122, %v1012, %v1129
      %1131 = vst [vmem:[%s974 + $0x10] sm:$0xff] %v1130
      %v1132 = vld [vmem:[%s974 + $0x18] sm:$0xff]
      %v1133 = vsel %vm1122, %v1019, %v1132
      %1134 = vst [vmem:[%s974 + $0x18] sm:$0xff] %v1133
      %v1135 = vld [vmem:[%s974 + $0x20] sm:$0xff]
      %v1136 = vsel %vm1122, %v1026, %v1135
      %1137 = vst [vmem:[%s974 + $0x20] sm:$0xff] %v1136
      %v1138 = vld [vmem:[%s974 + $0x28] sm:$0xff]
      %v1139 = vsel %vm1122, %v1033, %v1138
      %1140 = vst [vmem:[%s974 + $0x28] sm:$0xff] %v1139
      %v1141 = vld [vmem:[%s974 + $0x30] sm:$0xff]
      %v1142 = vsel %vm1122, %v1040, %v1141
      %1143 = vst [vmem:[%s974 + $0x30] sm:$0xff] %v1142
      %v1144 = vld [vmem:[%s974 + $0x38] sm:$0xff]
      %v1145 = vsel %vm1122, %v1047, %v1144
      %1146 = vst [vmem:[%s974 + $0x38] sm:$0xff] %v1145
      %v1147 = vld [vmem:[%s974 + $0x40] sm:$0xff]
      %v1148 = vsel %vm1122, %v1054, %v1147
      %1149 = vst [vmem:[%s974 + $0x40] sm:$0xff] %v1148
      %v1150 = vld [vmem:[%s974 + $0x48] sm:$0xff]
      %v1151 = vsel %vm1122, %v1061, %v1150
      %1152 = vst [vmem:[%s974 + $0x48] sm:$0xff] %v1151
      %v1153 = vld [vmem:[%s974 + $0x50] sm:$0xff]
      %v1154 = vsel %vm1122, %v1068, %v1153
      %1155 = vst [vmem:[%s974 + $0x50] sm:$0xff] %v1154
      %v1156 = vld [vmem:[%s974 + $0x58] sm:$0xff]
      %v1157 = vsel %vm1122, %v1075, %v1156
      %1158 = vst [vmem:[%s974 + $0x58] sm:$0xff] %v1157
      %v1159 = vld [vmem:[%s974 + $0x60] sm:$0xff]
      %v1160 = vsel %vm1122, %v1082, %v1159
      %1161 = vst [vmem:[%s974 + $0x60] sm:$0xff] %v1160
      %v1162 = vld [vmem:[%s974 + $0x68] sm:$0xff]
      %v1163 = vsel %vm1122, %v1089, %v1162
      %1164 = vst [vmem:[%s974 + $0x68] sm:$0xff] %v1163
      %v1165 = vld [vmem:[%s974 + $0x70] sm:$0xff]
      %v1166 = vsel %vm1122, %v1096, %v1165
      %1167 = vst [vmem:[%s974 + $0x70] sm:$0xff] %v1166
      %v1168 = vld [vmem:[%s974 + $0x78] sm:$0xff]
      %v1169 = vsel %vm1122, %v1103, %v1168
      %1170 = vst [vmem:[%s974 + $0x78] sm:$0xff] %v1169
      %v1171 = vrot.slane %v996, 1
      %v1172 = vor.u32 %v993, %v1171
      %v1173 = vrot.slane %v1003, 1
      %v1174 = vor.u32 %v1000, %v1173
      %v1175 = vrot.slane %v1010, 1
      %v1176 = vor.u32 %v1007, %v1175
      %v1177 = vrot.slane %v1017, 1
      %v1178 = vor.u32 %v1014, %v1177
      %v1179 = vrot.slane %v1024, 1
      %v1180 = vor.u32 %v1021, %v1179
      %v1181 = vrot.slane %v1031, 1
      %v1182 = vor.u32 %v1028, %v1181
      %v1183 = vrot.slane %v1038, 1
      %v1184 = vor.u32 %v1035, %v1183
      %v1185 = vrot.slane %v1045, 1
      %v1186 = vor.u32 %v1042, %v1185
      %v1187 = vrot.slane %v1052, 1
      %v1188 = vor.u32 %v1049, %v1187
      %v1189 = vrot.slane %v1059, 1
      %v1190 = vor.u32 %v1056, %v1189
      %v1191 = vrot.slane %v1066, 1
      %v1192 = vor.u32 %v1063, %v1191
      %v1193 = vrot.slane %v1073, 1
      %v1194 = vor.u32 %v1070, %v1193
      %v1195 = vrot.slane %v1080, 1
      %v1196 = vor.u32 %v1077, %v1195
      %v1197 = vrot.slane %v1087, 1
      %v1198 = vor.u32 %v1084, %v1197
      %v1199 = vrot.slane %v1094, 1
      %v1200 = vor.u32 %v1091, %v1199
      %v1201 = vrot.slane %v1101, 1
      %v1202 = vor.u32 %v1098, %v1201
      %1203 = vrot.lane.b32.xlu0 %v1172, 32
      %v1204 = vpop.permute.xlu0 %1203
      %1205 = vrot.lane.b32.xlu0 %v1174, 32
      %v1206 = vpop.permute.xlu0 %1205
      %1207 = vrot.lane.b32.xlu0 %v1176, 32
      %v1208 = vpop.permute.xlu0 %1207
      %1209 = vrot.lane.b32.xlu0 %v1178, 32
      %v1210 = vpop.permute.xlu0 %1209
      %1211 = vrot.lane.b32.xlu0 %v1180, 32
      %v1212 = vpop.permute.xlu0 %1211
      %1213 = vrot.lane.b32.xlu0 %v1182, 32
      %v1214 = vpop.permute.xlu0 %1213
      %1215 = vrot.lane.b32.xlu0 %v1184, 32
      %v1216 = vpop.permute.xlu0 %1215
      %1217 = vrot.lane.b32.xlu0 %v1186, 32
      %v1218 = vpop.permute.xlu0 %1217
      %1219 = vrot.lane.b32.xlu0 %v1188, 32
      %v1220 = vpop.permute.xlu0 %1219
      %1221 = vrot.lane.b32.xlu0 %v1190, 32
      %v1222 = vpop.permute.xlu0 %1221
      %1223 = vrot.lane.b32.xlu0 %v1192, 32
      %v1224 = vpop.permute.xlu0 %1223
      %1225 = vrot.lane.b32.xlu0 %v1194, 32
      %v1226 = vpop.permute.xlu0 %1225
      %1227 = vrot.lane.b32.xlu0 %v1196, 32
      %v1228 = vpop.permute.xlu0 %1227
      %1229 = vrot.lane.b32.xlu0 %v1198, 32
      %v1230 = vpop.permute.xlu0 %1229
      %1231 = vrot.lane.b32.xlu0 %v1200, 32
      %v1232 = vpop.permute.xlu0 %1231
      %1233 = vrot.lane.b32.xlu0 %v1202, 32
      %v1234 = vpop.permute.xlu0 %1233
      %vm1251 = vcmask 392448
      %vm1252 = vsmask.f32 7424
      %vm1253 = vmand %vm1251, %vm1252
      %v1254 = vld [vmem:[%s974] sm:$0xff]
      %v1255 = vsel %vm1253, %v1204, %v1254
      %1256 = vst [vmem:[%s974] sm:$0xff] %v1255
      %v1257 = vld [vmem:[%s974 + $0x8] sm:$0xff]
      %v1258 = vsel %vm1253, %v1206, %v1257
      %1259 = vst [vmem:[%s974 + $0x8] sm:$0xff] %v1258
      %v1260 = vld [vmem:[%s974 + $0x10] sm:$0xff]
      %v1261 = vsel %vm1253, %v1208, %v1260
      %1262 = vst [vmem:[%s974 + $0x10] sm:$0xff] %v1261
      %v1263 = vld [vmem:[%s974 + $0x18] sm:$0xff]
      %v1264 = vsel %vm1253, %v1210, %v1263
      %1265 = vst [vmem:[%s974 + $0x18] sm:$0xff] %v1264
      %v1266 = vld [vmem:[%s974 + $0x20] sm:$0xff]
      %v1267 = vsel %vm1253, %v1212, %v1266
      %1268 = vst [vmem:[%s974 + $0x20] sm:$0xff] %v1267
      %v1269 = vld [vmem:[%s974 + $0x28] sm:$0xff]
      %v1270 = vsel %vm1253, %v1214, %v1269
      %1271 = vst [vmem:[%s974 + $0x28] sm:$0xff] %v1270
      %v1272 = vld [vmem:[%s974 + $0x30] sm:$0xff]
      %v1273 = vsel %vm1253, %v1216, %v1272
      %1274 = vst [vmem:[%s974 + $0x30] sm:$0xff] %v1273
      %v1275 = vld [vmem:[%s974 + $0x38] sm:$0xff]
      %v1276 = vsel %vm1253, %v1218, %v1275
      %1277 = vst [vmem:[%s974 + $0x38] sm:$0xff] %v1276
      %v1278 = vld [vmem:[%s974 + $0x40] sm:$0xff]
      %v1279 = vsel %vm1253, %v1220, %v1278
      %1280 = vst [vmem:[%s974 + $0x40] sm:$0xff] %v1279
      %v1281 = vld [vmem:[%s974 + $0x48] sm:$0xff]
      %v1282 = vsel %vm1253, %v1222, %v1281
      %1283 = vst [vmem:[%s974 + $0x48] sm:$0xff] %v1282
      %v1284 = vld [vmem:[%s974 + $0x50] sm:$0xff]
      %v1285 = vsel %vm1253, %v1224, %v1284
      %1286 = vst [vmem:[%s974 + $0x50] sm:$0xff] %v1285
      %v1287 = vld [vmem:[%s974 + $0x58] sm:$0xff]
      %v1288 = vsel %vm1253, %v1226, %v1287
      %1289 = vst [vmem:[%s974 + $0x58] sm:$0xff] %v1288
      %v1290 = vld [vmem:[%s974 + $0x60] sm:$0xff]
      %v1291 = vsel %vm1253, %v1228, %v1290
      %1292 = vst [vmem:[%s974 + $0x60] sm:$0xff] %v1291
      %v1293 = vld [vmem:[%s974 + $0x68] sm:$0xff]
      %v1294 = vsel %vm1253, %v1230, %v1293
      %1295 = vst [vmem:[%s974 + $0x68] sm:$0xff] %v1294
      %v1296 = vld [vmem:[%s974 + $0x70] sm:$0xff]
      %v1297 = vsel %vm1253, %v1232, %v1296
      %1298 = vst [vmem:[%s974 + $0x70] sm:$0xff] %v1297
      %v1299 = vld [vmem:[%s974 + $0x78] sm:$0xff]
      %v1300 = vsel %vm1253, %v1234, %v1299
      %1301 = vst [vmem:[%s974 + $0x78] sm:$0xff] %v1300
      %v1302 = vld [vmem:[%s456] sm:$0xf]
      %v1303 = vld [vmem:[%s456 + $0x4] sm:$0xf]
      %p1304 = scmp.gt.s32.totalorder %s25, 0
      %v1307 = vunpack.c.l.b16 %v1302
      %v1308 = vunpack.c.l.b16 %v1303
      %v1309 = vpack.c.b16 %v1308, %v1307
      %v1311 = vsel %vm652, %v1309, 0
      %1313 = vmatprep.subr.bf16.mxu0 0
      %1314 = vmatpush1.bf16.msra.mxu0 %v644
      %1315 = vmatprep.subr.bf16.mxu0 0
      %1316 = vmatpush1.bf16.msra.mxu0 %v645
      %1317 = vmatprep.subr.bf16.mxu0 0
      %1318 = vmatpush1.bf16.msra.mxu0 %v646
      %1319 = vmatprep.subr.bf16.mxu0 0
      %1320 = vmatpush1.bf16.msra.mxu0 %v647
      %1321 = vmatprep.subr.bf16.mxu0 0
      %1322 = vmatpush1.bf16.msra.mxu0 0
      %1323 = vmatprep.subr.bf16.mxu0 0
      %1324 = vmatpush1.bf16.msra.mxu0 0
      %1325 = vmatprep.subr.bf16.mxu0 0
      %1326 = vmatpush1.bf16.msra.mxu0 0
      %1327 = vmatprep.subr.bf16.mxu0 0
      %1328 = vmatpush1.bf16.msra.mxu0 0
      %1329 = vmatprep.subr.bf16.mxu0 0
      %1330 = vmatpush1.bf16.msra.mxu0 0
      %1331 = vmatprep.subr.bf16.mxu0 0
      %1332 = vmatpush1.bf16.msra.mxu0 0
      %1333 = vmatprep.subr.bf16.mxu0 0
      %1334 = vmatpush1.bf16.msra.mxu0 0
      %1335 = vmatprep.subr.bf16.mxu0 0
      %1336 = vmatpush1.bf16.msra.mxu0 0
      %1337 = vmatprep.subr.bf16.mxu0 0
      %1338 = vmatpush1.bf16.msra.mxu0 0
      %1339 = vmatprep.subr.bf16.mxu0 0
      %1340 = vmatpush1.bf16.msra.mxu0 0
      %1341 = vmatprep.subr.bf16.mxu0 0
      %1342 = vmatpush1.bf16.msra.mxu0 0
      %1343 = vmatprep.subr.bf16.mxu0 0
      %1344 = vmatpush1.bf16.msra.mxu0 0
      %1345 = vmatprep.mubr.bf16.mxu0 0
      %1346 = vmatmul.mubr.bf16.gmra.mrb[0].mxu0 %v1311
      %v1347 = vpop.f32.mrb[0].mxu0
      %v1348 = vadd.f32 %v546, %v1347
      %v1349 = vpop.f32.mrb[0].mxu0
      %v1350 = vpop.f32.mrb[0].mxu0
      %v1351 = vadd.f32 %v546, %v1350
      %v1352 = vpop.f32.mrb[0].mxu0
      %1353 = vdwg.mxu0
      %v1354 = vmax.f32 %v1348, 0.0
      %v1355 = vmax.f32 %v1351, 0.0
      %s1356 = scalar_select %p1304, 1, 0
      %v1357 = vstv %s1356
      %vm1358 = vcmp.eq.s32.totalorder %v1357, 1
      %v1359 = vsel %vm1358, %v1354, 0.0
      %v1360 = vsel %vm1358, %v1355, 0.0
      %v1361 = vpack.c.bf16 %v1360, %v1359
      %1363 = vrot.lane.b32.xlu0 %v1361, 16
      %v1364 = vpop.permute.xlu0 %1363
      %1366 = vst.msk [vmem:[#allocation2] sm:$0xff] %vm975, %v1364
      %v1368 = vshrl.u32 %v1361, 16
      %v1370 = vrot.slane %v1368, 7
      %v1371 = vshll.u32 %v1361, 16
      %v1373 = vor.u32 %v1370, %v1371
      %v1375 = vld [vmem:[#allocation2] sm:$0xff]
      %v1376 = vsel %vm1122, %v1373, %v1375
      %1377 = vst [vmem:[#allocation2] sm:$0xff] %v1376
      %v1378 = vrot.slane %v1371, 1
      %v1379 = vor.u32 %v1368, %v1378
      %1380 = vrot.lane.b32.xlu0 %v1379, 32
      %v1381 = vpop.permute.xlu0 %1380
      %v1383 = vld [vmem:[#allocation2] sm:$0xff]
      %v1384 = vsel %vm1253, %v1381, %v1383
      %1385 = vst [vmem:[#allocation2] sm:$0xff] %v1384
      %v1386 = vld [vmem:[%s484] sm:$0xf]
      %v1387 = vld [vmem:[%s484 + $0x4] sm:$0xf]
      %p1388 = scmp.lt.s32.totalorder %s25, 0
      %v1391 = vunpack.c.l.b16 %v1386
      %v1392 = vunpack.c.l.b16 %v1387
      %v1393 = vpack.c.b16 %v1392, %v1391
      %v1395 = vsel %vm652, %v1393, 0
      %1397 = vmatprep.subr.bf16.mxu0 0
      %1398 = vmatpush1.bf16.msra.mxu0 %v644
      %1399 = vmatprep.subr.bf16.mxu0 0
      %1400 = vmatpush1.bf16.msra.mxu0 %v645
      %1401 = vmatprep.subr.bf16.mxu0 0
      %1402 = vmatpush1.bf16.msra.mxu0 %v646
      %1403 = vmatprep.subr.bf16.mxu0 0
      %1404 = vmatpush1.bf16.msra.mxu0 %v647
      %1405 = vmatprep.subr.bf16.mxu0 0
      %1406 = vmatpush1.bf16.msra.mxu0 0
      %1407 = vmatprep.subr.bf16.mxu0 0
      %1408 = vmatpush1.bf16.msra.mxu0 0
      %1409 = vmatprep.subr.bf16.mxu0 0
      %1410 = vmatpush1.bf16.msra.mxu0 0
      %1411 = vmatprep.subr.bf16.mxu0 0
      %1412 = vmatpush1.bf16.msra.mxu0 0
      %1413 = vmatprep.subr.bf16.mxu0 0
      %1414 = vmatpush1.bf16.msra.mxu0 0
      %1415 = vmatprep.subr.bf16.mxu0 0
      %1416 = vmatpush1.bf16.msra.mxu0 0
      %1417 = vmatprep.subr.bf16.mxu0 0
      %1418 = vmatpush1.bf16.msra.mxu0 0
      %1419 = vmatprep.subr.bf16.mxu0 0
      %1420 = vmatpush1.bf16.msra.mxu0 0
      %1421 = vmatprep.subr.bf16.mxu0 0
      %1422 = vmatpush1.bf16.msra.mxu0 0
      %1423 = vmatprep.subr.bf16.mxu0 0
      %1424 = vmatpush1.bf16.msra.mxu0 0
      %1425 = vmatprep.subr.bf16.mxu0 0
      %1426 = vmatpush1.bf16.msra.mxu0 0
      %1427 = vmatprep.subr.bf16.mxu0 0
      %1428 = vmatpush1.bf16.msra.mxu0 0
      %1429 = vmatprep.mubr.bf16.mxu0 0
      %1430 = vmatmul.mubr.bf16.gmra.mrb[0].mxu0 %v1395
      %v1431 = vpop.f32.mrb[0].mxu0
      %v1432 = vadd.f32 %v546, %v1431
      %v1433 = vpop.f32.mrb[0].mxu0
      %v1434 = vpop.f32.mrb[0].mxu0
      %v1435 = vadd.f32 %v546, %v1434
      %v1436 = vpop.f32.mrb[0].mxu0
      %1437 = vdwg.mxu0
      %v1438 = vmax.f32 %v1432, 0.0
      %v1439 = vmax.f32 %v1435, 0.0
      %s1440 = scalar_select %p1388, 1, 0
      %v1441 = vstv %s1440
      %vm1442 = vcmp.eq.s32.totalorder %v1441, 1
      %v1443 = vsel %vm1442, %v1438, 0.0
      %v1444 = vsel %vm1442, %v1439, 0.0
      %v1445 = vpack.c.bf16 %v1444, %v1443
      %1447 = vrot.lane.b32.xlu0 %v1445, 16
      %v1448 = vpop.permute.xlu0 %1447
      %s1450 = scalar_lea.vmem [#allocation2], 136
      %1451 = vst.msk [vmem:[%s1450] sm:$0xff] %vm975, %v1448
      %v1453 = vshrl.u32 %v1445, 16
      %v1455 = vrot.slane %v1453, 7
      %v1456 = vshll.u32 %v1445, 16
      %v1458 = vor.u32 %v1455, %v1456
      %v1460 = vld [vmem:[%s1450] sm:$0xff]
      %v1461 = vsel %vm1122, %v1458, %v1460
      %1462 = vst [vmem:[%s1450] sm:$0xff] %v1461
      %v1463 = vrot.slane %v1456, 1
      %v1464 = vor.u32 %v1453, %v1463
      %1465 = vrot.lane.b32.xlu0 %v1464, 32
      %v1466 = vpop.permute.xlu0 %1465
      %v1468 = vld [vmem:[%s1450] sm:$0xff]
      %v1469 = vsel %vm1253, %v1466, %v1468
      %1470 = vst [vmem:[%s1450] sm:$0xff] %v1469
      %vm1471 = vcmask 122880
      %vm1472 = vsmask.f32 256
      %vm1473 = vmand %vm1471, %vm1472
      %v1474 = vld [vmem:[#allocation2] sm:$0x1]
      %v1475 = vsel %vm1473, 0, %v1474
      %1476 = vst [vmem:[#allocation2] sm:$0x1] %v1475
      %v1477 = vld [vmem:[#allocation2 + $0x8] sm:$0x1]
      %v1478 = vsel %vm1473, 0, %v1477
      %1479 = vst [vmem:[#allocation2 + $0x8] sm:$0x1] %v1478
      %v1480 = vld [vmem:[#allocation2 + $0x10] sm:$0x1]
      %v1481 = vsel %vm1473, 0, %v1480
      %1482 = vst [vmem:[#allocation2 + $0x10] sm:$0x1] %v1481
      %v1483 = vld [vmem:[#allocation2 + $0x18] sm:$0x1]
      %v1484 = vsel %vm1473, 0, %v1483
      %1485 = vst [vmem:[#allocation2 + $0x18] sm:$0x1] %v1484
      %v1486 = vld [vmem:[#allocation2 + $0x20] sm:$0x1]
      %v1487 = vsel %vm1473, 0, %v1486
      %1488 = vst [vmem:[#allocation2 + $0x20] sm:$0x1] %v1487
      %v1489 = vld [vmem:[#allocation2 + $0x28] sm:$0x1]
      %v1490 = vsel %vm1473, 0, %v1489
      %1491 = vst [vmem:[#allocation2 + $0x28] sm:$0x1] %v1490
      %v1492 = vld [vmem:[#allocation2 + $0x30] sm:$0x1]
      %v1493 = vsel %vm1473, 0, %v1492
      %1494 = vst [vmem:[#allocation2 + $0x30] sm:$0x1] %v1493
      %v1495 = vld [vmem:[#allocation2 + $0x38] sm:$0x1]
      %v1496 = vsel %vm1473, 0, %v1495
      %1497 = vst [vmem:[#allocation2 + $0x38] sm:$0x1] %v1496
      %v1498 = vld [vmem:[#allocation2 + $0x40] sm:$0x1]
      %v1499 = vsel %vm1473, 0, %v1498
      %1500 = vst [vmem:[#allocation2 + $0x40] sm:$0x1] %v1499
      %v1501 = vld [vmem:[#allocation2 + $0x48] sm:$0x1]
      %v1502 = vsel %vm1473, 0, %v1501
      %1503 = vst [vmem:[#allocation2 + $0x48] sm:$0x1] %v1502
      %v1504 = vld [vmem:[#allocation2 + $0x50] sm:$0x1]
      %v1505 = vsel %vm1473, 0, %v1504
      %1506 = vst [vmem:[#allocation2 + $0x50] sm:$0x1] %v1505
      %v1507 = vld [vmem:[#allocation2 + $0x58] sm:$0x1]
      %v1508 = vsel %vm1473, 0, %v1507
      %1509 = vst [vmem:[#allocation2 + $0x58] sm:$0x1] %v1508
      %v1510 = vld [vmem:[#allocation2 + $0x60] sm:$0x1]
      %v1511 = vsel %vm1473, 0, %v1510
      %1512 = vst [vmem:[#allocation2 + $0x60] sm:$0x1] %v1511
      %v1513 = vld [vmem:[#allocation2 + $0x68] sm:$0x1]
      %v1514 = vsel %vm1473, 0, %v1513
      %1515 = vst [vmem:[#allocation2 + $0x68] sm:$0x1] %v1514
      %v1516 = vld [vmem:[#allocation2 + $0x70] sm:$0x1]
      %v1517 = vsel %vm1473, 0, %v1516
      %1518 = vst [vmem:[#allocation2 + $0x70] sm:$0x1] %v1517
      %v1519 = vld [vmem:[#allocation2 + $0x78] sm:$0x1]
      %v1520 = vsel %vm1473, 0, %v1519
      %1521 = vst [vmem:[#allocation2 + $0x78] sm:$0x1] %v1520
      %v1522 = vld [vmem:[#allocation2 + $0x80] sm:$0x1]
      %v1523 = vsel %vm1473, 0, %v1522
      %1524 = vst [vmem:[#allocation2 + $0x80] sm:$0x1] %v1523
      %v1525 = vld [vmem:[#allocation2 + $0x88] sm:$0x1]
      %v1526 = vsel %vm1473, 0, %v1525
      %1527 = vst [vmem:[#allocation2 + $0x88] sm:$0x1] %v1526
      %vm1528 = vcmask 392455
      %vm1529 = vsmask.f32 7966
      %vm1530 = vmand %vm1528, %vm1529
      %v1531 = vld [vmem:[#allocation2] sm:$0x80]
      %v1532 = vsel %vm1530, 0, %v1531
      %1533 = vst [vmem:[#allocation2] sm:$0x80] %v1532
      %v1534 = vld [vmem:[#allocation2 + $0x8] sm:$0x80]
      %v1535 = vsel %vm1530, 0, %v1534
      %1536 = vst [vmem:[#allocation2 + $0x8] sm:$0x80] %v1535
      %v1537 = vld [vmem:[#allocation2 + $0x10] sm:$0x80]
      %v1538 = vsel %vm1530, 0, %v1537
      %1539 = vst [vmem:[#allocation2 + $0x10] sm:$0x80] %v1538
      %v1540 = vld [vmem:[#allocation2 + $0x18] sm:$0x80]
      %v1541 = vsel %vm1530, 0, %v1540
      %1542 = vst [vmem:[#allocation2 + $0x18] sm:$0x80] %v1541
      %v1543 = vld [vmem:[#allocation2 + $0x20] sm:$0x80]
      %v1544 = vsel %vm1530, 0, %v1543
      %1545 = vst [vmem:[#allocation2 + $0x20] sm:$0x80] %v1544
      %v1546 = vld [vmem:[#allocation2 + $0x28] sm:$0x80]
      %v1547 = vsel %vm1530, 0, %v1546
      %1548 = vst [vmem:[#allocation2 + $0x28] sm:$0x80] %v1547
      %v1549 = vld [vmem:[#allocation2 + $0x30] sm:$0x80]
      %v1550 = vsel %vm1530, 0, %v1549
      %1551 = vst [vmem:[#allocation2 + $0x30] sm:$0x80] %v1550
      %v1552 = vld [vmem:[#allocation2 + $0x38] sm:$0x80]
      %v1553 = vsel %vm1530, 0, %v1552
      %1554 = vst [vmem:[#allocation2 + $0x38] sm:$0x80] %v1553
      %v1555 = vld [vmem:[#allocation2 + $0x40] sm:$0x80]
      %v1556 = vsel %vm1530, 0, %v1555
      %1557 = vst [vmem:[#allocation2 + $0x40] sm:$0x80] %v1556
      %v1558 = vld [vmem:[#allocation2 + $0x48] sm:$0x80]
      %v1559 = vsel %vm1530, 0, %v1558
      %1560 = vst [vmem:[#allocation2 + $0x48] sm:$0x80] %v1559
      %v1561 = vld [vmem:[#allocation2 + $0x50] sm:$0x80]
      %v1562 = vsel %vm1530, 0, %v1561
      %1563 = vst [vmem:[#allocation2 + $0x50] sm:$0x80] %v1562
      %v1564 = vld [vmem:[#allocation2 + $0x58] sm:$0x80]
      %v1565 = vsel %vm1530, 0, %v1564
      %1566 = vst [vmem:[#allocation2 + $0x58] sm:$0x80] %v1565
      %v1567 = vld [vmem:[#allocation2 + $0x60] sm:$0x80]
      %v1568 = vsel %vm1530, 0, %v1567
      %1569 = vst [vmem:[#allocation2 + $0x60] sm:$0x80] %v1568
      %v1570 = vld [vmem:[#allocation2 + $0x68] sm:$0x80]
      %v1571 = vsel %vm1530, 0, %v1570
      %1572 = vst [vmem:[#allocation2 + $0x68] sm:$0x80] %v1571
      %v1573 = vld [vmem:[#allocation2 + $0x70] sm:$0x80]
      %v1574 = vsel %vm1530, 0, %v1573
      %1575 = vst [vmem:[#allocation2 + $0x70] sm:$0x80] %v1574
      %v1576 = vld [vmem:[#allocation2 + $0x78] sm:$0x80]
      %v1577 = vsel %vm1530, 0, %v1576
      %1578 = vst [vmem:[#allocation2 + $0x78] sm:$0x80] %v1577
      %v1579 = vld [vmem:[#allocation2 + $0x80] sm:$0x80]
      %v1580 = vsel %vm1530, 0, %v1579
      %1581 = vst [vmem:[#allocation2 + $0x80] sm:$0x80] %v1580
      %v1582 = vld [vmem:[#allocation2 + $0x88] sm:$0x80]
      %v1583 = vsel %vm1530, 0, %v1582
      %1584 = vst [vmem:[#allocation2 + $0x88] sm:$0x80] %v1583
      %v1585 = vld [vmem:[#allocation2] sm:$0xff]
      %v1586 = vld [vmem:[#allocation2 + $0x8] sm:$0xff]
      %v1587 = vld [vmem:[#allocation2 + $0x10] sm:$0xff]
      %v1588 = vld [vmem:[#allocation2 + $0x18] sm:$0xff]
      %v1589 = vld [vmem:[#allocation2 + $0x20] sm:$0xff]
      %v1590 = vld [vmem:[#allocation2 + $0x28] sm:$0xff]
      %v1591 = vld [vmem:[#allocation2 + $0x30] sm:$0xff]
      %v1592 = vld [vmem:[#allocation2 + $0x38] sm:$0xff]
      %v1593 = vld [vmem:[#allocation2 + $0x40] sm:$0xff]
      %v1594 = vld [vmem:[#allocation2 + $0x48] sm:$0xff]
      %v1595 = vld [vmem:[#allocation2 + $0x50] sm:$0xff]
      %v1596 = vld [vmem:[#allocation2 + $0x58] sm:$0xff]
      %v1597 = vld [vmem:[#allocation2 + $0x60] sm:$0xff]
      %v1598 = vld [vmem:[#allocation2 + $0x68] sm:$0xff]
      %v1599 = vld [vmem:[#allocation2 + $0x70] sm:$0xff]
      %v1600 = vld [vmem:[#allocation2 + $0x78] sm:$0xff]
      %v1601 = vld [vmem:[%s5] sm:$0xf]
      %v1602 = vld [vmem:[%s5 + $0x4] sm:$0xf]
      %v1603 = vld [vmem:[%s5 + $0x8] sm:$0xf]
      %v1604 = vld [vmem:[%s5 + $0xc] sm:$0xf]
      %v1605 = vld [vmem:[%s5 + $0x10] sm:$0xf]
      %v1606 = vld [vmem:[%s5 + $0x14] sm:$0xf]
      %v1607 = vld [vmem:[%s974] sm:$0xff]
      %v1608 = vld [vmem:[%s974 + $0x8] sm:$0xff]
      %v1609 = vld [vmem:[%s974 + $0x10] sm:$0xff]
      %v1610 = vld [vmem:[%s974 + $0x18] sm:$0xff]
      %v1611 = vld [vmem:[%s974 + $0x20] sm:$0xff]
      %v1612 = vld [vmem:[%s974 + $0x28] sm:$0xff]
      %v1613 = vld [vmem:[%s974 + $0x30] sm:$0xff]
      %v1614 = vld [vmem:[%s974 + $0x38] sm:$0xff]
      %v1615 = vld [vmem:[%s974 + $0x40] sm:$0xff]
      %v1616 = vld [vmem:[%s974 + $0x48] sm:$0xff]
      %v1617 = vld [vmem:[%s974 + $0x50] sm:$0xff]
      %v1618 = vld [vmem:[%s974 + $0x58] sm:$0xff]
      %v1619 = vld [vmem:[%s974 + $0x60] sm:$0xff]
      %v1620 = vld [vmem:[%s974 + $0x68] sm:$0xff]
      %v1621 = vld [vmem:[%s974 + $0x70] sm:$0xff]
      %v1622 = vld [vmem:[%s974 + $0x78] sm:$0xff]
      %s1623 = scalar_lea.vmem %s5, 24
      %v1624 = vld [vmem:[%s1623] sm:$0xf]
      %v1625 = vld [vmem:[%s1623 + $0x4] sm:$0xf]
      %v1626 = vld [vmem:[%s1623 + $0x8] sm:$0xf]
      %v1627 = vld [vmem:[%s1623 + $0xc] sm:$0xf]
      %v1628 = vld [vmem:[%s1623 + $0x10] sm:$0xf]
      %v1629 = vld [vmem:[%s1623 + $0x14] sm:$0xf]
      %v1636 = vunpack.c.l.b16 %v1624
      %v1637 = vunpack.c.l.b16 %v1625
      %v1638 = vunpack.c.l.b16 %v1626
      %v1639 = vunpack.c.l.b16 %v1627
      %v1640 = vunpack.c.l.b16 %v1628
      %v1641 = vunpack.c.l.b16 %v1629
      %v1642 = vpack.c.b16 %v1637, %v1636
      %v1643 = vpack.c.b16 %v1639, %v1638
      %v1644 = vpack.c.b16 %v1641, %v1640
      %vm1648 = vcmask 392192
      %v1650 = vsel %vm1648, %v1607, 0
      %v1653 = vsel %vm1648, %v1608, 0
      %v1656 = vsel %vm1648, %v1609, 0
      %v1659 = vsel %vm1648, %v1610, 0
      %v1662 = vsel %vm1648, %v1611, 0
      %v1665 = vsel %vm1648, %v1612, 0
      %v1668 = vsel %vm1648, %v1613, 0
      %v1671 = vsel %vm1648, %v1614, 0
      %v1674 = vsel %vm1648, %v1615, 0
      %v1677 = vsel %vm1648, %v1616, 0
      %v1680 = vsel %vm1648, %v1617, 0
      %v1683 = vsel %vm1648, %v1618, 0
      %v1686 = vsel %vm1648, %v1619, 0
      %v1689 = vsel %vm1648, %v1620, 0
      %v1692 = vsel %vm1648, %v1621, 0
      %v1695 = vsel %vm1648, %v1622, 0
      %1697 = vmatprep.subr.bf16.mxu0 0
      %1698 = vmatpush1.bf16.msra.mxu0 %v1642
      %1699 = vmatprep.subr.bf16.mxu0 0
      %1700 = vmatpush1.bf16.msra.mxu0 %v1643
      %1701 = vmatprep.subr.bf16.mxu0 0
      %1702 = vmatpush1.bf16.msra.mxu0 %v1644
      %1703 = vmatprep.subr.bf16.mxu0 0
      %1704 = vmatpush1.bf16.msra.mxu0 0
      %1705 = vmatprep.subr.bf16.mxu0 0
      %1706 = vmatpush1.bf16.msra.mxu0 0
      %1707 = vmatprep.subr.bf16.mxu0 0
      %1708 = vmatpush1.bf16.msra.mxu0 0
      %1709 = vmatprep.subr.bf16.mxu0 0
      %1710 = vmatpush1.bf16.msra.mxu0 0
      %1711 = vmatprep.subr.bf16.mxu0 0
      %1712 = vmatpush1.bf16.msra.mxu0 0
      %1713 = vmatprep.subr.bf16.mxu0 0
      %1714 = vmatpush1.bf16.msra.mxu0 0
      %1715 = vmatprep.subr.bf16.mxu0 0
      %1716 = vmatpush1.bf16.msra.mxu0 0
      %1717 = vmatprep.subr.bf16.mxu0 0
      %1718 = vmatpush1.bf16.msra.mxu0 0
      %1719 = vmatprep.subr.bf16.mxu0 0
      %1720 = vmatpush1.bf16.msra.mxu0 0
      %1721 = vmatprep.subr.bf16.mxu0 0
      %1722 = vmatpush1.bf16.msra.mxu0 0
      %1723 = vmatprep.subr.bf16.mxu0 0
      %1724 = vmatpush1.bf16.msra.mxu0 0
      %1725 = vmatprep.subr.bf16.mxu0 0
      %1726 = vmatpush1.bf16.msra.mxu0 0
      %1727 = vmatprep.subr.bf16.mxu0 0
      %1728 = vmatpush1.bf16.msra.mxu0 0
      %1729 = vmatprep.mubr.bf16.mxu0 0
      %1730 = vmatmul.mubr.bf16.gmra.mrb[0].mxu0 %v1650
      %v1731 = vpop.f32.mrb[0].mxu0
      %v1732 = vadd.f32 0.0, %v1731
      %v1733 = vpop.f32.mrb[0].mxu0
      %v1734 = vpop.f32.mrb[0].mxu0
      %v1735 = vadd.f32 0.0, %v1734
      %v1736 = vpop.f32.mrb[0].mxu0
      %1737 = vmatprep.mubr.bf16.mxu0 0
      %1738 = vmatmul.mubr.bf16.gmra.mrb[0].mxu0 %v1653
      %v1739 = vpop.f32.mrb[0].mxu0
      %v1740 = vadd.f32 0.0, %v1739
      %v1741 = vpop.f32.mrb[0].mxu0
      %v1742 = vpop.f32.mrb[0].mxu0
      %v1743 = vadd.f32 0.0, %v1742
      %v1744 = vpop.f32.mrb[0].mxu0
      %1745 = vmatprep.mubr.bf16.mxu0 0
      %1746 = vmatmul.mubr.bf16.gmra.mrb[0].mxu0 %v1656
      %v1747 = vpop.f32.mrb[0].mxu0
      %v1748 = vadd.f32 0.0, %v1747
      %v1749 = vpop.f32.mrb[0].mxu0
      %v1750 = vpop.f32.mrb[0].mxu0
      %v1751 = vadd.f32 0.0, %v1750
      %v1752 = vpop.f32.mrb[0].mxu0
      %1753 = vmatprep.mubr.bf16.mxu0 0
      %1754 = vmatmul.mubr.bf16.gmra.mrb[0].mxu0 %v1659
      %v1755 = vpop.f32.mrb[0].mxu0
      %v1756 = vadd.f32 0.0, %v1755
      %v1757 = vpop.f32.mrb[0].mxu0
      %v1758 = vpop.f32.mrb[0].mxu0
      %v1759 = vadd.f32 0.0, %v1758
      %v1760 = vpop.f32.mrb[0].mxu0
      %1761 = vmatprep.mubr.bf16.mxu0 0
      %1762 = vmatmul.mubr.bf16.gmra.mrb[0].mxu0 %v1662
      %v1763 = vpop.f32.mrb[0].mxu0
      %v1764 = vadd.f32 0.0, %v1763
      %v1765 = vpop.f32.mrb[0].mxu0
      %v1766 = vpop.f32.mrb[0].mxu0
      %v1767 = vadd.f32 0.0, %v1766
      %v1768 = vpop.f32.mrb[0].mxu0
      %1769 = vmatprep.mubr.bf16.mxu0 0
      %1770 = vmatmul.mubr.bf16.gmra.mrb[0].mxu0 %v1665
      %v1771 = vpop.f32.mrb[0].mxu0
      %v1772 = vadd.f32 0.0, %v1771
      %v1773 = vpop.f32.mrb[0].mxu0
      %v1774 = vpop.f32.mrb[0].mxu0
      %v1775 = vadd.f32 0.0, %v1774
      %v1776 = vpop.f32.mrb[0].mxu0
      %1777 = vmatprep.mubr.bf16.mxu0 0
      %1778 = vmatmul.mubr.bf16.gmra.mrb[0].mxu0 %v1668
      %v1779 = vpop.f32.mrb[0].mxu0
      %v1780 = vadd.f32 0.0, %v1779
      %v1781 = vpop.f32.mrb[0].mxu0
      %v1782 = vpop.f32.mrb[0].mxu0
      %v1783 = vadd.f32 0.0, %v1782
      %v1784 = vpop.f32.mrb[0].mxu0
      %1785 = vmatprep.mubr.bf16.mxu0 0
      %1786 = vmatmul.mubr.bf16.gmra.mrb[0].mxu0 %v1671
      %v1787 = vpop.f32.mrb[0].mxu0
      %v1788 = vadd.f32 0.0, %v1787
      %v1789 = vpop.f32.mrb[0].mxu0
      %v1790 = vpop.f32.mrb[0].mxu0
      %v1791 = vadd.f32 0.0, %v1790
      %v1792 = vpop.f32.mrb[0].mxu0
      %1793 = vmatprep.mubr.bf16.mxu0 0
      %1794 = vmatmul.mubr.bf16.gmra.mrb[0].mxu0 %v1674
      %v1795 = vpop.f32.mrb[0].mxu0
      %v1796 = vadd.f32 0.0, %v1795
      %v1797 = vpop.f32.mrb[0].mxu0
      %v1798 = vpop.f32.mrb[0].mxu0
      %v1799 = vadd.f32 0.0, %v1798
      %v1800 = vpop.f32.mrb[0].mxu0
      %1801 = vmatprep.mubr.bf16.mxu0 0
      %1802 = vmatmul.mubr.bf16.gmra.mrb[0].mxu0 %v1677
      %v1803 = vpop.f32.mrb[0].mxu0
      %v1804 = vadd.f32 0.0, %v1803
      %v1805 = vpop.f32.mrb[0].mxu0
      %v1806 = vpop.f32.mrb[0].mxu0
      %v1807 = vadd.f32 0.0, %v1806
      %v1808 = vpop.f32.mrb[0].mxu0
      %1809 = vmatprep.mubr.bf16.mxu0 0
      %1810 = vmatmul.mubr.bf16.gmra.mrb[0].mxu0 %v1680
      %v1811 = vpop.f32.mrb[0].mxu0
      %v1812 = vadd.f32 0.0, %v1811
      %v1813 = vpop.f32.mrb[0].mxu0
      %v1814 = vpop.f32.mrb[0].mxu0
      %v1815 = vadd.f32 0.0, %v1814
      %v1816 = vpop.f32.mrb[0].mxu0
      %1817 = vmatprep.mubr.bf16.mxu0 0
      %1818 = vmatmul.mubr.bf16.gmra.mrb[0].mxu0 %v1683
      %v1819 = vpop.f32.mrb[0].mxu0
      %v1820 = vadd.f32 0.0, %v1819
      %v1821 = vpop.f32.mrb[0].mxu0
      %v1822 = vpop.f32.mrb[0].mxu0
      %v1823 = vadd.f32 0.0, %v1822
      %v1824 = vpop.f32.mrb[0].mxu0
      %1825 = vmatprep.mubr.bf16.mxu0 0
      %1826 = vmatmul.mubr.bf16.gmra.mrb[0].mxu0 %v1686
      %v1827 = vpop.f32.mrb[0].mxu0
      %v1828 = vadd.f32 0.0, %v1827
      %v1829 = vpop.f32.mrb[0].mxu0
      %v1830 = vpop.f32.mrb[0].mxu0
      %v1831 = vadd.f32 0.0, %v1830
      %v1832 = vpop.f32.mrb[0].mxu0
      %1833 = vmatprep.mubr.bf16.mxu0 0
      %1834 = vmatmul.mubr.bf16.gmra.mrb[0].mxu0 %v1689
      %v1835 = vpop.f32.mrb[0].mxu0
      %v1836 = vadd.f32 0.0, %v1835
      %v1837 = vpop.f32.mrb[0].mxu0
      %v1838 = vpop.f32.mrb[0].mxu0
      %v1839 = vadd.f32 0.0, %v1838
      %v1840 = vpop.f32.mrb[0].mxu0
      %1841 = vmatprep.mubr.bf16.mxu0 0
      %1842 = vmatmul.mubr.bf16.gmra.mrb[0].mxu0 %v1692
      %v1843 = vpop.f32.mrb[0].mxu0
      %v1844 = vadd.f32 0.0, %v1843
      %v1845 = vpop.f32.mrb[0].mxu0
      %v1846 = vpop.f32.mrb[0].mxu0
      %v1847 = vadd.f32 0.0, %v1846
      %v1848 = vpop.f32.mrb[0].mxu0
      %1849 = vmatprep.mubr.bf16.mxu0 0
      %1850 = vmatmul.mubr.bf16.gmra.mrb[0].mxu0 %v1695
      %v1851 = vpop.f32.mrb[0].mxu0
      %v1852 = vadd.f32 0.0, %v1851
      %v1853 = vpop.f32.mrb[0].mxu0
      %v1854 = vpop.f32.mrb[0].mxu0
      %v1855 = vadd.f32 0.0, %v1854
      %v1856 = vpop.f32.mrb[0].mxu0
      %1857 = vdwg.mxu0
      %v1864 = vunpack.c.l.b16 %v1601
      %v1865 = vunpack.c.l.b16 %v1602
      %v1866 = vunpack.c.l.b16 %v1603
      %v1867 = vunpack.c.l.b16 %v1604
      %v1868 = vunpack.c.l.b16 %v1605
      %v1869 = vunpack.c.l.b16 %v1606
      %v1870 = vpack.c.b16 %v1865, %v1864
      %v1871 = vpack.c.b16 %v1867, %v1866
      %v1872 = vpack.c.b16 %v1869, %v1868
      %v1877 = vsel %vm1648, %v1585, 0
      %v1880 = vsel %vm1648, %v1586, 0
      %v1883 = vsel %vm1648, %v1587, 0
      %v1886 = vsel %vm1648, %v1588, 0
      %v1889 = vsel %vm1648, %v1589, 0
      %v1892 = vsel %vm1648, %v1590, 0
      %v1895 = vsel %vm1648, %v1591, 0
      %v1898 = vsel %vm1648, %v1592, 0
      %v1901 = vsel %vm1648, %v1593, 0
      %v1904 = vsel %vm1648, %v1594, 0
      %v1907 = vsel %vm1648, %v1595, 0
      %v1910 = vsel %vm1648, %v1596, 0
      %v1913 = vsel %vm1648, %v1597, 0
      %v1916 = vsel %vm1648, %v1598, 0
      %v1919 = vsel %vm1648, %v1599, 0
      %v1922 = vsel %vm1648, %v1600, 0
      %1924 = vmatprep.subr.bf16.mxu0 0
      %1925 = vmatpush1.bf16.msra.mxu0 %v1870
      %1926 = vmatprep.subr.bf16.mxu0 0
      %1927 = vmatpush1.bf16.msra.mxu0 %v1871
      %1928 = vmatprep.subr.bf16.mxu0 0
      %1929 = vmatpush1.bf16.msra.mxu0 %v1872
      %1930 = vmatprep.subr.bf16.mxu0 0
      %1931 = vmatpush1.bf16.msra.mxu0 0
      %1932 = vmatprep.subr.bf16.mxu0 0
      %1933 = vmatpush1.bf16.msra.mxu0 0
      %1934 = vmatprep.subr.bf16.mxu0 0
      %1935 = vmatpush1.bf16.msra.mxu0 0
      %1936 = vmatprep.subr.bf16.mxu0 0
      %1937 = vmatpush1.bf16.msra.mxu0 0
      %1938 = vmatprep.subr.bf16.mxu0 0
      %1939 = vmatpush1.bf16.msra.mxu0 0
      %1940 = vmatprep.subr.bf16.mxu0 0
      %1941 = vmatpush1.bf16.msra.mxu0 0
      %1942 = vmatprep.subr.bf16.mxu0 0
      %1943 = vmatpush1.bf16.msra.mxu0 0
      %1944 = vmatprep.subr.bf16.mxu0 0
      %1945 = vmatpush1.bf16.msra.mxu0 0
      %1946 = vmatprep.subr.bf16.mxu0 0
      %1947 = vmatpush1.bf16.msra.mxu0 0
      %1948 = vmatprep.subr.bf16.mxu0 0
      %1949 = vmatpush1.bf16.msra.mxu0 0
      %1950 = vmatprep.subr.bf16.mxu0 0
      %1951 = vmatpush1.bf16.msra.mxu0 0
      %1952 = vmatprep.subr.bf16.mxu0 0
      %1953 = vmatpush1.bf16.msra.mxu0 0
      %1954 = vmatprep.subr.bf16.mxu0 0
      %1955 = vmatpush1.bf16.msra.mxu0 0
      %1956 = vmatprep.mubr.bf16.mxu0 0
      %1957 = vmatmul.mubr.bf16.gmra.mrb[0].mxu0 %v1877
      %v1958 = vpop.f32.mrb[0].mxu0
      %v1959 = vadd.f32 %v1732, %v1958
      %v1960 = vpop.f32.mrb[0].mxu0
      %v1961 = vpop.f32.mrb[0].mxu0
      %v1962 = vadd.f32 %v1735, %v1961
      %v1963 = vpop.f32.mrb[0].mxu0
      %1964 = vmatprep.mubr.bf16.mxu0 0
      %1965 = vmatmul.mubr.bf16.gmra.mrb[0].mxu0 %v1880
      %v1966 = vpop.f32.mrb[0].mxu0
      %v1967 = vadd.f32 %v1740, %v1966
      %v1968 = vpop.f32.mrb[0].mxu0
      %v1969 = vpop.f32.mrb[0].mxu0
      %v1970 = vadd.f32 %v1743, %v1969
      %v1971 = vpop.f32.mrb[0].mxu0
      %1972 = vmatprep.mubr.bf16.mxu0 0
      %1973 = vmatmul.mubr.bf16.gmra.mrb[0].mxu0 %v1883
      %v1974 = vpop.f32.mrb[0].mxu0
      %v1975 = vadd.f32 %v1748, %v1974
      %v1976 = vpop.f32.mrb[0].mxu0
      %v1977 = vpop.f32.mrb[0].mxu0
      %v1978 = vadd.f32 %v1751, %v1977
      %v1979 = vpop.f32.mrb[0].mxu0
      %1980 = vmatprep.mubr.bf16.mxu0 0
      %1981 = vmatmul.mubr.bf16.gmra.mrb[0].mxu0 %v1886
      %v1982 = vpop.f32.mrb[0].mxu0
      %v1983 = vadd.f32 %v1756, %v1982
      %v1984 = vpop.f32.mrb[0].mxu0
      %v1985 = vpop.f32.mrb[0].mxu0
      %v1986 = vadd.f32 %v1759, %v1985
      %v1987 = vpop.f32.mrb[0].mxu0
      %1988 = vmatprep.mubr.bf16.mxu0 0
      %1989 = vmatmul.mubr.bf16.gmra.mrb[0].mxu0 %v1889
      %v1990 = vpop.f32.mrb[0].mxu0
      %v1991 = vadd.f32 %v1764, %v1990
      %v1992 = vpop.f32.mrb[0].mxu0
      %v1993 = vpop.f32.mrb[0].mxu0
      %v1994 = vadd.f32 %v1767, %v1993
      %v1995 = vpop.f32.mrb[0].mxu0
      %1996 = vmatprep.mubr.bf16.mxu0 0
      %1997 = vmatmul.mubr.bf16.gmra.mrb[0].mxu0 %v1892
      %v1998 = vpop.f32.mrb[0].mxu0
      %v1999 = vadd.f32 %v1772, %v1998
      %v2000 = vpop.f32.mrb[0].mxu0
      %v2001 = vpop.f32.mrb[0].mxu0
      %v2002 = vadd.f32 %v1775, %v2001
      %v2003 = vpop.f32.mrb[0].mxu0
      %2004 = vmatprep.mubr.bf16.mxu0 0
      %2005 = vmatmul.mubr.bf16.gmra.mrb[0].mxu0 %v1895
      %v2006 = vpop.f32.mrb[0].mxu0
      %v2007 = vadd.f32 %v1780, %v2006
      %v2008 = vpop.f32.mrb[0].mxu0
      %v2009 = vpop.f32.mrb[0].mxu0
      %v2010 = vadd.f32 %v1783, %v2009
      %v2011 = vpop.f32.mrb[0].mxu0
      %2012 = vmatprep.mubr.bf16.mxu0 0
      %2013 = vmatmul.mubr.bf16.gmra.mrb[0].mxu0 %v1898
      %v2014 = vpop.f32.mrb[0].mxu0
      %v2015 = vadd.f32 %v1788, %v2014
      %v2016 = vpop.f32.mrb[0].mxu0
      %v2017 = vpop.f32.mrb[0].mxu0
      %v2018 = vadd.f32 %v1791, %v2017
      %v2019 = vpop.f32.mrb[0].mxu0
      %2020 = vmatprep.mubr.bf16.mxu0 0
      %2021 = vmatmul.mubr.bf16.gmra.mrb[0].mxu0 %v1901
      %v2022 = vpop.f32.mrb[0].mxu0
      %v2023 = vadd.f32 %v1796, %v2022
      %v2024 = vpop.f32.mrb[0].mxu0
      %v2025 = vpop.f32.mrb[0].mxu0
      %v2026 = vadd.f32 %v1799, %v2025
      %v2027 = vpop.f32.mrb[0].mxu0
      %2028 = vmatprep.mubr.bf16.mxu0 0
      %2029 = vmatmul.mubr.bf16.gmra.mrb[0].mxu0 %v1904
      %v2030 = vpop.f32.mrb[0].mxu0
      %v2031 = vadd.f32 %v1804, %v2030
      %v2032 = vpop.f32.mrb[0].mxu0
      %v2033 = vpop.f32.mrb[0].mxu0
      %v2034 = vadd.f32 %v1807, %v2033
      %v2035 = vpop.f32.mrb[0].mxu0
      %2036 = vmatprep.mubr.bf16.mxu0 0
      %2037 = vmatmul.mubr.bf16.gmra.mrb[0].mxu0 %v1907
      %v2038 = vpop.f32.mrb[0].mxu0
      %v2039 = vadd.f32 %v1812, %v2038
      %v2040 = vpop.f32.mrb[0].mxu0
      %v2041 = vpop.f32.mrb[0].mxu0
      %v2042 = vadd.f32 %v1815, %v2041
      %v2043 = vpop.f32.mrb[0].mxu0
      %2044 = vmatprep.mubr.bf16.mxu0 0
      %2045 = vmatmul.mubr.bf16.gmra.mrb[0].mxu0 %v1910
      %v2046 = vpop.f32.mrb[0].mxu0
      %v2047 = vadd.f32 %v1820, %v2046
      %v2048 = vpop.f32.mrb[0].mxu0
      %v2049 = vpop.f32.mrb[0].mxu0
      %v2050 = vadd.f32 %v1823, %v2049
      %v2051 = vpop.f32.mrb[0].mxu0
      %2052 = vmatprep.mubr.bf16.mxu0 0
      %2053 = vmatmul.mubr.bf16.gmra.mrb[0].mxu0 %v1913
      %v2054 = vpop.f32.mrb[0].mxu0
      %v2055 = vadd.f32 %v1828, %v2054
      %v2056 = vpop.f32.mrb[0].mxu0
      %v2057 = vpop.f32.mrb[0].mxu0
      %v2058 = vadd.f32 %v1831, %v2057
      %v2059 = vpop.f32.mrb[0].mxu0
      %2060 = vmatprep.mubr.bf16.mxu0 0
      %2061 = vmatmul.mubr.bf16.gmra.mrb[0].mxu0 %v1916
      %v2062 = vpop.f32.mrb[0].mxu0
      %v2063 = vadd.f32 %v1836, %v2062
      %v2064 = vpop.f32.mrb[0].mxu0
      %v2065 = vpop.f32.mrb[0].mxu0
      %v2066 = vadd.f32 %v1839, %v2065
      %v2067 = vpop.f32.mrb[0].mxu0
      %2068 = vmatprep.mubr.bf16.mxu0 0
      %2069 = vmatmul.mubr.bf16.gmra.mrb[0].mxu0 %v1919
      %v2070 = vpop.f32.mrb[0].mxu0
      %v2071 = vadd.f32 %v1844, %v2070
      %v2072 = vpop.f32.mrb[0].mxu0
      %v2073 = vpop.f32.mrb[0].mxu0
      %v2074 = vadd.f32 %v1847, %v2073
      %v2075 = vpop.f32.mrb[0].mxu0
      %2076 = vmatprep.mubr.bf16.mxu0 0
      %2077 = vmatmul.mubr.bf16.gmra.mrb[0].mxu0 %v1922
      %v2078 = vpop.f32.mrb[0].mxu0
      %v2079 = vadd.f32 %v1852, %v2078
      %v2080 = vpop.f32.mrb[0].mxu0
      %v2081 = vpop.f32.mrb[0].mxu0
      %v2082 = vadd.f32 %v1855, %v2081
      %v2083 = vpop.f32.mrb[0].mxu0
      %2084 = vdwg.mxu0
      %s2085 = scalar_lea.vmem [#allocation2], 16
      %v2086 = vld [vmem:[%s2085] sm:$0xff]
      %v2087 = vld [vmem:[%s2085 + $0x8] sm:$0xff]
      %v2088 = vld [vmem:[%s2085 + $0x10] sm:$0xff]
      %v2089 = vld [vmem:[%s2085 + $0x18] sm:$0xff]
      %v2090 = vld [vmem:[%s2085 + $0x20] sm:$0xff]
      %v2091 = vld [vmem:[%s2085 + $0x28] sm:$0xff]
      %v2092 = vld [vmem:[%s2085 + $0x30] sm:$0xff]
      %v2093 = vld [vmem:[%s2085 + $0x38] sm:$0xff]
      %v2094 = vld [vmem:[%s2085 + $0x40] sm:$0xff]
      %v2095 = vld [vmem:[%s2085 + $0x48] sm:$0xff]
      %v2096 = vld [vmem:[%s2085 + $0x50] sm:$0xff]
      %v2097 = vld [vmem:[%s2085 + $0x58] sm:$0xff]
      %v2098 = vld [vmem:[%s2085 + $0x60] sm:$0xff]
      %v2099 = vld [vmem:[%s2085 + $0x68] sm:$0xff]
      %v2100 = vld [vmem:[%s2085 + $0x70] sm:$0xff]
      %v2101 = vld [vmem:[%s2085 + $0x78] sm:$0xff]
      %s2102 = scalar_lea.vmem %s5, 48
      %v2103 = vld [vmem:[%s2102] sm:$0xf]
      %v2104 = vld [vmem:[%s2102 + $0x4] sm:$0xf]
      %v2105 = vld [vmem:[%s2102 + $0x8] sm:$0xf]
      %v2106 = vld [vmem:[%s2102 + $0xc] sm:$0xf]
      %v2107 = vld [vmem:[%s2102 + $0x10] sm:$0xf]
      %v2108 = vld [vmem:[%s2102 + $0x14] sm:$0xf]
      %v2115 = vunpack.c.l.b16 %v2103
      %v2116 = vunpack.c.l.b16 %v2104
      %v2117 = vunpack.c.l.b16 %v2105
      %v2118 = vunpack.c.l.b16 %v2106
      %v2119 = vunpack.c.l.b16 %v2107
      %v2120 = vunpack.c.l.b16 %v2108
      %v2121 = vpack.c.b16 %v2116, %v2115
      %v2122 = vpack.c.b16 %v2118, %v2117
      %v2123 = vpack.c.b16 %v2120, %v2119
      %v2128 = vsel %vm1648, %v2086, 0
      %v2131 = vsel %vm1648, %v2087, 0
      %v2134 = vsel %vm1648, %v2088, 0
      %v2137 = vsel %vm1648, %v2089, 0
      %v2140 = vsel %vm1648, %v2090, 0
      %v2143 = vsel %vm1648, %v2091, 0
      %v2146 = vsel %vm1648, %v2092, 0
      %v2149 = vsel %vm1648, %v2093, 0
      %v2152 = vsel %vm1648, %v2094, 0
      %v2155 = vsel %vm1648, %v2095, 0
      %v2158 = vsel %vm1648, %v2096, 0
      %v2161 = vsel %vm1648, %v2097, 0
      %v2164 = vsel %vm1648, %v2098, 0
      %v2167 = vsel %vm1648, %v2099, 0
      %v2170 = vsel %vm1648, %v2100, 0
      %v2173 = vsel %vm1648, %v2101, 0
      %2175 = vmatprep.subr.bf16.mxu0 0
      %2176 = vmatpush1.bf16.msra.mxu0 %v2121
      %2177 = vmatprep.subr.bf16.mxu0 0
      %2178 = vmatpush1.bf16.msra.mxu0 %v2122
      %2179 = vmatprep.subr.bf16.mxu0 0
      %2180 = vmatpush1.bf16.msra.mxu0 %v2123
      %2181 = vmatprep.subr.bf16.mxu0 0
      %2182 = vmatpush1.bf16.msra.mxu0 0
      %2183 = vmatprep.subr.bf16.mxu0 0
      %2184 = vmatpush1.bf16.msra.mxu0 0
      %2185 = vmatprep.subr.bf16.mxu0 0
      %2186 = vmatpush1.bf16.msra.mxu0 0
      %2187 = vmatprep.subr.bf16.mxu0 0
      %2188 = vmatpush1.bf16.msra.mxu0 0
      %2189 = vmatprep.subr.bf16.mxu0 0
      %2190 = vmatpush1.bf16.msra.mxu0 0
      %2191 = vmatprep.subr.bf16.mxu0 0
      %2192 = vmatpush1.bf16.msra.mxu0 0
      %2193 = vmatprep.subr.bf16.mxu0 0
      %2194 = vmatpush1.bf16.msra.mxu0 0
      %2195 = vmatprep.subr.bf16.mxu0 0
      %2196 = vmatpush1.bf16.msra.mxu0 0
      %2197 = vmatprep.subr.bf16.mxu0 0
      %2198 = vmatpush1.bf16.msra.mxu0 0
      %2199 = vmatprep.subr.bf16.mxu0 0
      %2200 = vmatpush1.bf16.msra.mxu0 0
      %2201 = vmatprep.subr.bf16.mxu0 0
      %2202 = vmatpush1.bf16.msra.mxu0 0
      %2203 = vmatprep.subr.bf16.mxu0 0
      %2204 = vmatpush1.bf16.msra.mxu0 0
      %2205 = vmatprep.subr.bf16.mxu0 0
      %2206 = vmatpush1.bf16.msra.mxu0 0
      %2207 = vmatprep.mubr.bf16.mxu0 0
      %2208 = vmatmul.mubr.bf16.gmra.mrb[0].mxu0 %v2128
      %v2209 = vpop.f32.mrb[0].mxu0
      %v2210 = vadd.f32 0.0, %v2209
      %v2211 = vpop.f32.mrb[0].mxu0
      %v2212 = vpop.f32.mrb[0].mxu0
      %v2213 = vadd.f32 0.0, %v2212
      %v2214 = vpop.f32.mrb[0].mxu0
      %2215 = vmatprep.mubr.bf16.mxu0 0
      %2216 = vmatmul.mubr.bf16.gmra.mrb[0].mxu0 %v2131
      %v2217 = vpop.f32.mrb[0].mxu0
      %v2218 = vadd.f32 0.0, %v2217
      %v2219 = vpop.f32.mrb[0].mxu0
      %v2220 = vpop.f32.mrb[0].mxu0
      %v2221 = vadd.f32 0.0, %v2220
      %v2222 = vpop.f32.mrb[0].mxu0
      %2223 = vmatprep.mubr.bf16.mxu0 0
      %2224 = vmatmul.mubr.bf16.gmra.mrb[0].mxu0 %v2134
      %v2225 = vpop.f32.mrb[0].mxu0
      %v2226 = vadd.f32 0.0, %v2225
      %v2227 = vpop.f32.mrb[0].mxu0
      %v2228 = vpop.f32.mrb[0].mxu0
      %v2229 = vadd.f32 0.0, %v2228
      %v2230 = vpop.f32.mrb[0].mxu0
      %2231 = vmatprep.mubr.bf16.mxu0 0
      %2232 = vmatmul.mubr.bf16.gmra.mrb[0].mxu0 %v2137
      %v2233 = vpop.f32.mrb[0].mxu0
      %v2234 = vadd.f32 0.0, %v2233
      %v2235 = vpop.f32.mrb[0].mxu0
      %v2236 = vpop.f32.mrb[0].mxu0
      %v2237 = vadd.f32 0.0, %v2236
      %v2238 = vpop.f32.mrb[0].mxu0
      %2239 = vmatprep.mubr.bf16.mxu0 0
      %2240 = vmatmul.mubr.bf16.gmra.mrb[0].mxu0 %v2140
      %v2241 = vpop.f32.mrb[0].mxu0
      %v2242 = vadd.f32 0.0, %v2241
      %v2243 = vpop.f32.mrb[0].mxu0
      %v2244 = vpop.f32.mrb[0].mxu0
      %v2245 = vadd.f32 0.0, %v2244
      %v2246 = vpop.f32.mrb[0].mxu0
      %2247 = vmatprep.mubr.bf16.mxu0 0
      %2248 = vmatmul.mubr.bf16.gmra.mrb[0].mxu0 %v2143
      %v2249 = vpop.f32.mrb[0].mxu0
      %v2250 = vadd.f32 0.0, %v2249
      %v2251 = vpop.f32.mrb[0].mxu0
      %v2252 = vpop.f32.mrb[0].mxu0
      %v2253 = vadd.f32 0.0, %v2252
      %v2254 = vpop.f32.mrb[0].mxu0
      %2255 = vmatprep.mubr.bf16.mxu0 0
      %2256 = vmatmul.mubr.bf16.gmra.mrb[0].mxu0 %v2146
      %v2257 = vpop.f32.mrb[0].mxu0
      %v2258 = vadd.f32 0.0, %v2257
      %v2259 = vpop.f32.mrb[0].mxu0
      %v2260 = vpop.f32.mrb[0].mxu0
      %v2261 = vadd.f32 0.0, %v2260
      %v2262 = vpop.f32.mrb[0].mxu0
      %2263 = vmatprep.mubr.bf16.mxu0 0
      %2264 = vmatmul.mubr.bf16.gmra.mrb[0].mxu0 %v2149
      %v2265 = vpop.f32.mrb[0].mxu0
      %v2266 = vadd.f32 0.0, %v2265
      %v2267 = vpop.f32.mrb[0].mxu0
      %v2268 = vpop.f32.mrb[0].mxu0
      %v2269 = vadd.f32 0.0, %v2268
      %v2270 = vpop.f32.mrb[0].mxu0
      %2271 = vmatprep.mubr.bf16.mxu0 0
      %2272 = vmatmul.mubr.bf16.gmra.mrb[0].mxu0 %v2152
      %v2273 = vpop.f32.mrb[0].mxu0
      %v2274 = vadd.f32 0.0, %v2273
      %v2275 = vpop.f32.mrb[0].mxu0
      %v2276 = vpop.f32.mrb[0].mxu0
      %v2277 = vadd.f32 0.0, %v2276
      %v2278 = vpop.f32.mrb[0].mxu0
      %2279 = vmatprep.mubr.bf16.mxu0 0
      %2280 = vmatmul.mubr.bf16.gmra.mrb[0].mxu0 %v2155
      %v2281 = vpop.f32.mrb[0].mxu0
      %v2282 = vadd.f32 0.0, %v2281
      %v2283 = vpop.f32.mrb[0].mxu0
      %v2284 = vpop.f32.mrb[0].mxu0
      %v2285 = vadd.f32 0.0, %v2284
      %v2286 = vpop.f32.mrb[0].mxu0
      %2287 = vmatprep.mubr.bf16.mxu0 0
      %2288 = vmatmul.mubr.bf16.gmra.mrb[0].mxu0 %v2158
      %v2289 = vpop.f32.mrb[0].mxu0
      %v2290 = vadd.f32 0.0, %v2289
      %v2291 = vpop.f32.mrb[0].mxu0
      %v2292 = vpop.f32.mrb[0].mxu0
      %v2293 = vadd.f32 0.0, %v2292
      %v2294 = vpop.f32.mrb[0].mxu0
      %2295 = vmatprep.mubr.bf16.mxu0 0
      %2296 = vmatmul.mubr.bf16.gmra.mrb[0].mxu0 %v2161
      %v2297 = vpop.f32.mrb[0].mxu0
      %v2298 = vadd.f32 0.0, %v2297
      %v2299 = vpop.f32.mrb[0].mxu0
      %v2300 = vpop.f32.mrb[0].mxu0
      %v2301 = vadd.f32 0.0, %v2300
      %v2302 = vpop.f32.mrb[0].mxu0
      %2303 = vmatprep.mubr.bf16.mxu0 0
      %2304 = vmatmul.mubr.bf16.gmra.mrb[0].mxu0 %v2164
      %v2305 = vpop.f32.mrb[0].mxu0
      %v2306 = vadd.f32 0.0, %v2305
      %v2307 = vpop.f32.mrb[0].mxu0
      %v2308 = vpop.f32.mrb[0].mxu0
      %v2309 = vadd.f32 0.0, %v2308
      %v2310 = vpop.f32.mrb[0].mxu0
      %2311 = vmatprep.mubr.bf16.mxu0 0
      %2312 = vmatmul.mubr.bf16.gmra.mrb[0].mxu0 %v2167
      %v2313 = vpop.f32.mrb[0].mxu0
      %v2314 = vadd.f32 0.0, %v2313
      %v2315 = vpop.f32.mrb[0].mxu0
      %v2316 = vpop.f32.mrb[0].mxu0
      %v2317 = vadd.f32 0.0, %v2316
      %v2318 = vpop.f32.mrb[0].mxu0
      %2319 = vmatprep.mubr.bf16.mxu0 0
      %2320 = vmatmul.mubr.bf16.gmra.mrb[0].mxu0 %v2170
      %v2321 = vpop.f32.mrb[0].mxu0
      %v2322 = vadd.f32 0.0, %v2321
      %v2323 = vpop.f32.mrb[0].mxu0
      %v2324 = vpop.f32.mrb[0].mxu0
      %v2325 = vadd.f32 0.0, %v2324
      %v2326 = vpop.f32.mrb[0].mxu0
      %2327 = vmatprep.mubr.bf16.mxu0 0
      %2328 = vmatmul.mubr.bf16.gmra.mrb[0].mxu0 %v2173
      %v2329 = vpop.f32.mrb[0].mxu0
      %v2330 = vadd.f32 0.0, %v2329
      %v2331 = vpop.f32.mrb[0].mxu0
      %v2332 = vpop.f32.mrb[0].mxu0
      %v2333 = vadd.f32 0.0, %v2332
      %v2334 = vpop.f32.mrb[0].mxu0
      %2335 = vdwg.mxu0
      %v2336 = vadd.f32 %v1959, %v2210
      %v2337 = vadd.f32 %v1962, %v2213
      %v2338 = vadd.f32 %v1967, %v2218
      %v2339 = vadd.f32 %v1970, %v2221
      %v2340 = vadd.f32 %v1975, %v2226
      %v2341 = vadd.f32 %v1978, %v2229
      %v2342 = vadd.f32 %v1983, %v2234
      %v2343 = vadd.f32 %v1986, %v2237
      %v2344 = vadd.f32 %v1991, %v2242
      %v2345 = vadd.f32 %v1994, %v2245
      %v2346 = vadd.f32 %v1999, %v2250
      %v2347 = vadd.f32 %v2002, %v2253
      %v2348 = vadd.f32 %v2007, %v2258
      %v2349 = vadd.f32 %v2010, %v2261
      %v2350 = vadd.f32 %v2015, %v2266
      %v2351 = vadd.f32 %v2018, %v2269
      %v2352 = vadd.f32 %v2023, %v2274
      %v2353 = vadd.f32 %v2026, %v2277
      %v2354 = vadd.f32 %v2031, %v2282
      %v2355 = vadd.f32 %v2034, %v2285
      %v2356 = vadd.f32 %v2039, %v2290
      %v2357 = vadd.f32 %v2042, %v2293
      %v2358 = vadd.f32 %v2047, %v2298
      %v2359 = vadd.f32 %v2050, %v2301
      %v2360 = vadd.f32 %v2055, %v2306
      %v2361 = vadd.f32 %v2058, %v2309
      %v2362 = vadd.f32 %v2063, %v2314
      %v2363 = vadd.f32 %v2066, %v2317
      %v2364 = vadd.f32 %v2071, %v2322
      %v2365 = vadd.f32 %v2074, %v2325
      %v2366 = vadd.f32 %v2079, %v2330
      %v2367 = vadd.f32 %v2082, %v2333
      %v2368 = vld [vmem:[%s6] sm:$0x1]
      %v2370 = vlaneseq
      %v2371 = vshrl.u32 %v2370, 7
      %v2372 = vsub.s32 0, %v2371
      %v2373 = vrot.slane %v2368, %v2372
      %v2375 = vadd.f32 %v2336, %v2373
      %v2376 = vadd.f32 %v2337, %v2373
      %v2377 = vadd.f32 %v2338, %v2373
      %v2378 = vadd.f32 %v2339, %v2373
      %v2379 = vadd.f32 %v2340, %v2373
      %v2380 = vadd.f32 %v2341, %v2373
      %v2381 = vadd.f32 %v2342, %v2373
      %v2382 = vadd.f32 %v2343, %v2373
      %v2383 = vadd.f32 %v2344, %v2373
      %v2384 = vadd.f32 %v2345, %v2373
      %v2385 = vadd.f32 %v2346, %v2373
      %v2386 = vadd.f32 %v2347, %v2373
      %v2387 = vadd.f32 %v2348, %v2373
      %v2388 = vadd.f32 %v2349, %v2373
      %v2389 = vadd.f32 %v2350, %v2373
      %v2390 = vadd.f32 %v2351, %v2373
      %v2391 = vadd.f32 %v2352, %v2373
      %v2392 = vadd.f32 %v2353, %v2373
      %v2393 = vadd.f32 %v2354, %v2373
      %v2394 = vadd.f32 %v2355, %v2373
      %v2395 = vadd.f32 %v2356, %v2373
      %v2396 = vadd.f32 %v2357, %v2373
      %v2397 = vadd.f32 %v2358, %v2373
      %v2398 = vadd.f32 %v2359, %v2373
      %v2399 = vadd.f32 %v2360, %v2373
      %v2400 = vadd.f32 %v2361, %v2373
      %v2401 = vadd.f32 %v2362, %v2373
      %v2402 = vadd.f32 %v2363, %v2373
      %v2403 = vadd.f32 %v2364, %v2373
      %v2404 = vadd.f32 %v2365, %v2373
      %v2405 = vadd.f32 %v2366, %v2373
      %v2406 = vadd.f32 %v2367, %v2373
      %v2407 = vmax.f32 %v2375, 0.0
      %v2408 = vmax.f32 %v2376, 0.0
      %v2409 = vmax.f32 %v2377, 0.0
      %v2410 = vmax.f32 %v2378, 0.0
      %v2411 = vmax.f32 %v2379, 0.0
      %v2412 = vmax.f32 %v2380, 0.0
      %v2413 = vmax.f32 %v2381, 0.0
      %v2414 = vmax.f32 %v2382, 0.0
      %v2415 = vmax.f32 %v2383, 0.0
      %v2416 = vmax.f32 %v2384, 0.0
      %v2417 = vmax.f32 %v2385, 0.0
      %v2418 = vmax.f32 %v2386, 0.0
      %v2419 = vmax.f32 %v2387, 0.0
      %v2420 = vmax.f32 %v2388, 0.0
      %v2421 = vmax.f32 %v2389, 0.0
      %v2422 = vmax.f32 %v2390, 0.0
      %v2423 = vmax.f32 %v2391, 0.0
      %v2424 = vmax.f32 %v2392, 0.0
      %v2425 = vmax.f32 %v2393, 0.0
      %v2426 = vmax.f32 %v2394, 0.0
      %v2427 = vmax.f32 %v2395, 0.0
      %v2428 = vmax.f32 %v2396, 0.0
      %v2429 = vmax.f32 %v2397, 0.0
      %v2430 = vmax.f32 %v2398, 0.0
      %v2431 = vmax.f32 %v2399, 0.0
      %v2432 = vmax.f32 %v2400, 0.0
      %v2433 = vmax.f32 %v2401, 0.0
      %v2434 = vmax.f32 %v2402, 0.0
      %v2435 = vmax.f32 %v2403, 0.0
      %v2436 = vmax.f32 %v2404, 0.0
      %v2437 = vmax.f32 %v2405, 0.0
      %v2438 = vmax.f32 %v2406, 0.0
      %v2439 = vpack.c.bf16 %v2408, %v2407
      %v2440 = vpack.c.bf16 %v2410, %v2409
      %v2441 = vpack.c.bf16 %v2412, %v2411
      %v2442 = vpack.c.bf16 %v2414, %v2413
      %v2443 = vpack.c.bf16 %v2416, %v2415
      %v2444 = vpack.c.bf16 %v2418, %v2417
      %v2445 = vpack.c.bf16 %v2420, %v2419
      %v2446 = vpack.c.bf16 %v2422, %v2421
      %v2447 = vpack.c.bf16 %v2424, %v2423
      %v2448 = vpack.c.bf16 %v2426, %v2425
      %v2449 = vpack.c.bf16 %v2428, %v2427
      %v2450 = vpack.c.bf16 %v2430, %v2429
      %v2451 = vpack.c.bf16 %v2432, %v2431
      %v2452 = vpack.c.bf16 %v2434, %v2433
      %v2453 = vpack.c.bf16 %v2436, %v2435
      %v2454 = vpack.c.bf16 %v2438, %v2437
      %v2455 = vld [vmem:[%s7] sm:$0xf]
      %v2456 = vld [vmem:[%s7 + $0x4] sm:$0xf]
      %v2457 = vld [vmem:[%s8] sm:$0x1]
      %v2459 = vlaneseq
      %v2460 = vshrl.u32 %v2459, 7
      %v2461 = vsub.s32 0, %v2460
      %v2462 = vrot.slane %v2457, %v2461
      %v2466 = vunpack.c.l.b16 %v2455
      %v2467 = vunpack.c.l.b16 %v2456
      %v2468 = vpack.c.b16 %v2467, %v2466
      %vm2470 = vcmask 130048
      %v2472 = vsel %vm2470, %v2439, 0
      %v2475 = vsel %vm2470, %v2440, 0
      %v2478 = vsel %vm2470, %v2441, 0
      %v2481 = vsel %vm2470, %v2442, 0
      %v2484 = vsel %vm2470, %v2443, 0
      %v2487 = vsel %vm2470, %v2444, 0
      %v2490 = vsel %vm2470, %v2445, 0
      %v2493 = vsel %vm2470, %v2446, 0
      %v2496 = vsel %vm2470, %v2447, 0
      %v2499 = vsel %vm2470, %v2448, 0
      %v2502 = vsel %vm2470, %v2449, 0
      %v2505 = vsel %vm2470, %v2450, 0
      %v2508 = vsel %vm2470, %v2451, 0
      %v2511 = vsel %vm2470, %v2452, 0
      %v2514 = vsel %vm2470, %v2453, 0
      %v2517 = vsel %vm2470, %v2454, 0
      %2519 = vmatprep.subr.bf16.mxu0 0
      %2520 = vmatpush1.bf16.msra.mxu0 %v2468
      %2521 = vmatprep.subr.bf16.mxu0 0
      %2522 = vmatpush1.bf16.msra.mxu0 0
      %2523 = vmatprep.subr.bf16.mxu0 0
      %2524 = vmatpush1.bf16.msra.mxu0 0
      %2525 = vmatprep.subr.bf16.mxu0 0
      %2526 = vmatpush1.bf16.msra.mxu0 0
      %2527 = vmatprep.subr.bf16.mxu0 0
      %2528 = vmatpush1.bf16.msra.mxu0 0
      %2529 = vmatprep.subr.bf16.mxu0 0
      %2530 = vmatpush1.bf16.msra.mxu0 0
      %2531 = vmatprep.subr.bf16.mxu0 0
      %2532 = vmatpush1.bf16.msra.mxu0 0
      %2533 = vmatprep.subr.bf16.mxu0 0
      %2534 = vmatpush1.bf16.msra.mxu0 0
      %2535 = vmatprep.subr.bf16.mxu0 0
      %2536 = vmatpush1.bf16.msra.mxu0 0
      %2537 = vmatprep.subr.bf16.mxu0 0
      %2538 = vmatpush1.bf16.msra.mxu0 0
      %2539 = vmatprep.subr.bf16.mxu0 0
      %2540 = vmatpush1.bf16.msra.mxu0 0
      %2541 = vmatprep.subr.bf16.mxu0 0
      %2542 = vmatpush1.bf16.msra.mxu0 0
      %2543 = vmatprep.subr.bf16.mxu0 0
      %2544 = vmatpush1.bf16.msra.mxu0 0
      %2545 = vmatprep.subr.bf16.mxu0 0
      %2546 = vmatpush1.bf16.msra.mxu0 0
      %2547 = vmatprep.subr.bf16.mxu0 0
      %2548 = vmatpush1.bf16.msra.mxu0 0
      %2549 = vmatprep.subr.bf16.mxu0 0
      %2550 = vmatpush1.bf16.msra.mxu0 0
      %2551 = vmatprep.mubr.bf16.mxu0 0
      %2552 = vmatmul.mubr.bf16.gmra.mrb[0].mxu0 %v2472
      %v2553 = vpop.f32.mrb[0].mxu0
      %v2554 = vadd.f32 %v2462, %v2553
      %v2555 = vpop.f32.mrb[0].mxu0
      %v2556 = vpop.f32.mrb[0].mxu0
      %v2557 = vadd.f32 %v2462, %v2556
      %v2558 = vpop.f32.mrb[0].mxu0
      %2559 = vmatprep.mubr.bf16.mxu0 0
      %2560 = vmatmul.mubr.bf16.gmra.mrb[0].mxu0 %v2475
      %v2561 = vpop.f32.mrb[0].mxu0
      %v2562 = vadd.f32 %v2462, %v2561
      %v2563 = vpop.f32.mrb[0].mxu0
      %v2564 = vpop.f32.mrb[0].mxu0
      %v2565 = vadd.f32 %v2462, %v2564
      %v2566 = vpop.f32.mrb[0].mxu0
      %2567 = vmatprep.mubr.bf16.mxu0 0
      %2568 = vmatmul.mubr.bf16.gmra.mrb[0].mxu0 %v2478
      %v2569 = vpop.f32.mrb[0].mxu0
      %v2570 = vadd.f32 %v2462, %v2569
      %v2571 = vpop.f32.mrb[0].mxu0
      %v2572 = vpop.f32.mrb[0].mxu0
      %v2573 = vadd.f32 %v2462, %v2572
      %v2574 = vpop.f32.mrb[0].mxu0
      %2575 = vmatprep.mubr.bf16.mxu0 0
      %2576 = vmatmul.mubr.bf16.gmra.mrb[0].mxu0 %v2481
      %v2577 = vpop.f32.mrb[0].mxu0
      %v2578 = vadd.f32 %v2462, %v2577
      %v2579 = vpop.f32.mrb[0].mxu0
      %v2580 = vpop.f32.mrb[0].mxu0
      %v2581 = vadd.f32 %v2462, %v2580
      %v2582 = vpop.f32.mrb[0].mxu0
      %2583 = vmatprep.mubr.bf16.mxu0 0
      %2584 = vmatmul.mubr.bf16.gmra.mrb[0].mxu0 %v2484
      %v2585 = vpop.f32.mrb[0].mxu0
      %v2586 = vadd.f32 %v2462, %v2585
      %v2587 = vpop.f32.mrb[0].mxu0
      %v2588 = vpop.f32.mrb[0].mxu0
      %v2589 = vadd.f32 %v2462, %v2588
      %v2590 = vpop.f32.mrb[0].mxu0
      %2591 = vmatprep.mubr.bf16.mxu0 0
      %2592 = vmatmul.mubr.bf16.gmra.mrb[0].mxu0 %v2487
      %v2593 = vpop.f32.mrb[0].mxu0
      %v2594 = vadd.f32 %v2462, %v2593
      %v2595 = vpop.f32.mrb[0].mxu0
      %v2596 = vpop.f32.mrb[0].mxu0
      %v2597 = vadd.f32 %v2462, %v2596
      %v2598 = vpop.f32.mrb[0].mxu0
      %2599 = vmatprep.mubr.bf16.mxu0 0
      %2600 = vmatmul.mubr.bf16.gmra.mrb[0].mxu0 %v2490
      %v2601 = vpop.f32.mrb[0].mxu0
      %v2602 = vadd.f32 %v2462, %v2601
      %v2603 = vpop.f32.mrb[0].mxu0
      %v2604 = vpop.f32.mrb[0].mxu0
      %v2605 = vadd.f32 %v2462, %v2604
      %v2606 = vpop.f32.mrb[0].mxu0
      %2607 = vmatprep.mubr.bf16.mxu0 0
      %2608 = vmatmul.mubr.bf16.gmra.mrb[0].mxu0 %v2493
      %v2609 = vpop.f32.mrb[0].mxu0
      %v2610 = vadd.f32 %v2462, %v2609
      %v2611 = vpop.f32.mrb[0].mxu0
      %v2612 = vpop.f32.mrb[0].mxu0
      %v2613 = vadd.f32 %v2462, %v2612
      %v2614 = vpop.f32.mrb[0].mxu0
      %2615 = vmatprep.mubr.bf16.mxu0 0
      %2616 = vmatmul.mubr.bf16.gmra.mrb[0].mxu0 %v2496
      %v2617 = vpop.f32.mrb[0].mxu0
      %v2618 = vadd.f32 %v2462, %v2617
      %v2619 = vpop.f32.mrb[0].mxu0
      %v2620 = vpop.f32.mrb[0].mxu0
      %v2621 = vadd.f32 %v2462, %v2620
      %v2622 = vpop.f32.mrb[0].mxu0
      %2623 = vmatprep.mubr.bf16.mxu0 0
      %2624 = vmatmul.mubr.bf16.gmra.mrb[0].mxu0 %v2499
      %v2625 = vpop.f32.mrb[0].mxu0
      %v2626 = vadd.f32 %v2462, %v2625
      %v2627 = vpop.f32.mrb[0].mxu0
      %v2628 = vpop.f32.mrb[0].mxu0
      %v2629 = vadd.f32 %v2462, %v2628
      %v2630 = vpop.f32.mrb[0].mxu0
      %2631 = vmatprep.mubr.bf16.mxu0 0
      %2632 = vmatmul.mubr.bf16.gmra.mrb[0].mxu0 %v2502
      %v2633 = vpop.f32.mrb[0].mxu0
      %v2634 = vadd.f32 %v2462, %v2633
      %v2635 = vpop.f32.mrb[0].mxu0
      %v2636 = vpop.f32.mrb[0].mxu0
      %v2637 = vadd.f32 %v2462, %v2636
      %v2638 = vpop.f32.mrb[0].mxu0
      %2639 = vmatprep.mubr.bf16.mxu0 0
      %2640 = vmatmul.mubr.bf16.gmra.mrb[0].mxu0 %v2505
      %v2641 = vpop.f32.mrb[0].mxu0
      %v2642 = vadd.f32 %v2462, %v2641
      %v2643 = vpop.f32.mrb[0].mxu0
      %v2644 = vpop.f32.mrb[0].mxu0
      %v2645 = vadd.f32 %v2462, %v2644
      %v2646 = vpop.f32.mrb[0].mxu0
      %2647 = vmatprep.mubr.bf16.mxu0 0
      %2648 = vmatmul.mubr.bf16.gmra.mrb[0].mxu0 %v2508
      %v2649 = vpop.f32.mrb[0].mxu0
      %v2650 = vadd.f32 %v2462, %v2649
      %v2651 = vpop.f32.mrb[0].mxu0
      %v2652 = vpop.f32.mrb[0].mxu0
      %v2653 = vadd.f32 %v2462, %v2652
      %v2654 = vpop.f32.mrb[0].mxu0
      %2655 = vmatprep.mubr.bf16.mxu0 0
      %2656 = vmatmul.mubr.bf16.gmra.mrb[0].mxu0 %v2511
      %v2657 = vpop.f32.mrb[0].mxu0
      %v2658 = vadd.f32 %v2462, %v2657
      %v2659 = vpop.f32.mrb[0].mxu0
      %v2660 = vpop.f32.mrb[0].mxu0
      %v2661 = vadd.f32 %v2462, %v2660
      %v2662 = vpop.f32.mrb[0].mxu0
      %2663 = vmatprep.mubr.bf16.mxu0 0
      %2664 = vmatmul.mubr.bf16.gmra.mrb[0].mxu0 %v2514
      %v2665 = vpop.f32.mrb[0].mxu0
      %v2666 = vadd.f32 %v2462, %v2665
      %v2667 = vpop.f32.mrb[0].mxu0
      %v2668 = vpop.f32.mrb[0].mxu0
      %v2669 = vadd.f32 %v2462, %v2668
      %v2670 = vpop.f32.mrb[0].mxu0
      %2671 = vmatprep.mubr.bf16.mxu0 0
      %2672 = vmatmul.mubr.bf16.gmra.mrb[0].mxu0 %v2517
      %v2673 = vpop.f32.mrb[0].mxu0
      %v2674 = vadd.f32 %v2462, %v2673
      %v2675 = vpop.f32.mrb[0].mxu0
      %v2676 = vpop.f32.mrb[0].mxu0
      %v2677 = vadd.f32 %v2462, %v2676
      %v2678 = vpop.f32.mrb[0].mxu0
      %2679 = vdwg.mxu0
      %v2680 = vld [vmem:[%s470] sm:$0xf]
      %v2681 = vld [vmem:[%s470 + $0x4] sm:$0xf]
      %v2682 = vld [vmem:[%s470 + $0x8] sm:$0xf]
      %v2683 = vld [vmem:[%s470 + $0xc] sm:$0xf]
      %v2684 = vld [vmem:[%s470 + $0x10] sm:$0xf]
      %v2685 = vld [vmem:[%s470 + $0x14] sm:$0xf]
      %v2686 = vld [vmem:[%s470 + $0x18] sm:$0xf]
      %v2687 = vld [vmem:[%s470 + $0x1c] sm:$0xf]
      %v2688 = vld [vmem:[%s470 + $0x20] sm:$0xf]
      %v2689 = vld [vmem:[%s470 + $0x24] sm:$0xf]
      %v2690 = vld [vmem:[%s470 + $0x28] sm:$0xf]
      %v2691 = vld [vmem:[%s470 + $0x2c] sm:$0xf]
      %v2692 = vld [vmem:[%s470 + $0x30] sm:$0xf]
      %v2693 = vld [vmem:[%s470 + $0x34] sm:$0xf]
      %v2694 = vld [vmem:[%s470 + $0x38] sm:$0xf]
      %v2695 = vld [vmem:[%s470 + $0x3c] sm:$0xf]
      %v2696 = vld [vmem:[%s470 + $0x40] sm:$0xf]
      %v2697 = vld [vmem:[%s470 + $0x44] sm:$0xf]
      %v2698 = vld [vmem:[%s470 + $0x48] sm:$0xf]
      %v2699 = vld [vmem:[%s470 + $0x4c] sm:$0xf]
      %v2700 = vld [vmem:[%s470 + $0x50] sm:$0xf]
      %v2701 = vld [vmem:[%s470 + $0x54] sm:$0xf]
      %v2702 = vld [vmem:[%s470 + $0x58] sm:$0xf]
      %v2703 = vld [vmem:[%s470 + $0x5c] sm:$0xf]
      %v2704 = vld [vmem:[%s470 + $0x60] sm:$0xf]
      %v2705 = vld [vmem:[%s470 + $0x64] sm:$0xf]
      %v2706 = vld [vmem:[%s470 + $0x68] sm:$0xf]
      %v2707 = vld [vmem:[%s470 + $0x6c] sm:$0xf]
      %v2708 = vld [vmem:[%s470 + $0x70] sm:$0xf]
      %v2709 = vld [vmem:[%s470 + $0x74] sm:$0xf]
      %v2710 = vld [vmem:[%s470 + $0x78] sm:$0xf]
      %v2711 = vld [vmem:[%s470 + $0x7c] sm:$0xf]
      %v2712 = vunpack.c.l.bf16 %v2680
      %v2713 = vunpack.c.l.bf16 %v2681
      %v2714 = vunpack.c.l.bf16 %v2682
      %v2715 = vunpack.c.l.bf16 %v2683
      %v2716 = vunpack.c.l.bf16 %v2684
      %v2717 = vunpack.c.l.bf16 %v2685
      %v2718 = vunpack.c.l.bf16 %v2686
      %v2719 = vunpack.c.l.bf16 %v2687
      %v2720 = vunpack.c.l.bf16 %v2688
      %v2721 = vunpack.c.l.bf16 %v2689
      %v2722 = vunpack.c.l.bf16 %v2690
      %v2723 = vunpack.c.l.bf16 %v2691
      %v2724 = vunpack.c.l.bf16 %v2692
      %v2725 = vunpack.c.l.bf16 %v2693
      %v2726 = vunpack.c.l.bf16 %v2694
      %v2727 = vunpack.c.l.bf16 %v2695
      %v2728 = vunpack.c.l.bf16 %v2696
      %v2729 = vunpack.c.l.bf16 %v2697
      %v2730 = vunpack.c.l.bf16 %v2698
      %v2731 = vunpack.c.l.bf16 %v2699
      %v2732 = vunpack.c.l.bf16 %v2700
      %v2733 = vunpack.c.l.bf16 %v2701
      %v2734 = vunpack.c.l.bf16 %v2702
      %v2735 = vunpack.c.l.bf16 %v2703
      %v2736 = vunpack.c.l.bf16 %v2704
      %v2737 = vunpack.c.l.bf16 %v2705
      %v2738 = vunpack.c.l.bf16 %v2706
      %v2739 = vunpack.c.l.bf16 %v2707
      %v2740 = vunpack.c.l.bf16 %v2708
      %v2741 = vunpack.c.l.bf16 %v2709
      %v2742 = vunpack.c.l.bf16 %v2710
      %v2743 = vunpack.c.l.bf16 %v2711
      %v2744 = vadd.f32 %v2554, %v2712
      %v2745 = vadd.f32 %v2557, %v2713
      %v2746 = vadd.f32 %v2562, %v2714
      %v2747 = vadd.f32 %v2565, %v2715
      %v2748 = vadd.f32 %v2570, %v2716
      %v2749 = vadd.f32 %v2573, %v2717
      %v2750 = vadd.f32 %v2578, %v2718
      %v2751 = vadd.f32 %v2581, %v2719
      %v2752 = vadd.f32 %v2586, %v2720
      %v2753 = vadd.f32 %v2589, %v2721
      %v2754 = vadd.f32 %v2594, %v2722
      %v2755 = vadd.f32 %v2597, %v2723
      %v2756 = vadd.f32 %v2602, %v2724
      %v2757 = vadd.f32 %v2605, %v2725
      %v2758 = vadd.f32 %v2610, %v2726
      %v2759 = vadd.f32 %v2613, %v2727
      %v2760 = vadd.f32 %v2618, %v2728
      %v2761 = vadd.f32 %v2621, %v2729
      %v2762 = vadd.f32 %v2626, %v2730
      %v2763 = vadd.f32 %v2629, %v2731
      %v2764 = vadd.f32 %v2634, %v2732
      %v2765 = vadd.f32 %v2637, %v2733
      %v2766 = vadd.f32 %v2642, %v2734
      %v2767 = vadd.f32 %v2645, %v2735
      %v2768 = vadd.f32 %v2650, %v2736
      %v2769 = vadd.f32 %v2653, %v2737
      %v2770 = vadd.f32 %v2658, %v2738
      %v2771 = vadd.f32 %v2661, %v2739
      %v2772 = vadd.f32 %v2666, %v2740
      %v2773 = vadd.f32 %v2669, %v2741
      %v2774 = vadd.f32 %v2674, %v2742
      %v2775 = vadd.f32 %v2677, %v2743
      %v2776 = vmax.f32 %v2744, 0.0
      %v2777 = vmax.f32 %v2745, 0.0
      %v2778 = vmax.f32 %v2746, 0.0
      %v2779 = vmax.f32 %v2747, 0.0
      %v2780 = vmax.f32 %v2748, 0.0
      %v2781 = vmax.f32 %v2749, 0.0
      %v2782 = vmax.f32 %v2750, 0.0
      %v2783 = vmax.f32 %v2751, 0.0
      %v2784 = vmax.f32 %v2752, 0.0
      %v2785 = vmax.f32 %v2753, 0.0
      %v2786 = vmax.f32 %v2754, 0.0
      %v2787 = vmax.f32 %v2755, 0.0
      %v2788 = vmax.f32 %v2756, 0.0
      %v2789 = vmax.f32 %v2757, 0.0
      %v2790 = vmax.f32 %v2758, 0.0
      %v2791 = vmax.f32 %v2759, 0.0
      %v2792 = vmax.f32 %v2760, 0.0
      %v2793 = vmax.f32 %v2761, 0.0
      %v2794 = vmax.f32 %v2762, 0.0
      %v2795 = vmax.f32 %v2763, 0.0
      %v2796 = vmax.f32 %v2764, 0.0
      %v2797 = vmax.f32 %v2765, 0.0
      %v2798 = vmax.f32 %v2766, 0.0
      %v2799 = vmax.f32 %v2767, 0.0
      %v2800 = vmax.f32 %v2768, 0.0
      %v2801 = vmax.f32 %v2769, 0.0
      %v2802 = vmax.f32 %v2770, 0.0
      %v2803 = vmax.f32 %v2771, 0.0
      %v2804 = vmax.f32 %v2772, 0.0
      %v2805 = vmax.f32 %v2773, 0.0
      %v2806 = vmax.f32 %v2774, 0.0
      %v2807 = vmax.f32 %v2775, 0.0
      %2808 = vst.msk [vmem:[%s498] sm:$0xff] %vm652, %v2776
      %2809 = vst.msk [vmem:[%s498 + $0x8] sm:$0xff] %vm652, %v2777
      %2810 = vst.msk [vmem:[%s498 + $0x10] sm:$0xff] %vm652, %v2778
      %2811 = vst.msk [vmem:[%s498 + $0x18] sm:$0xff] %vm652, %v2779
      %2812 = vst.msk [vmem:[%s498 + $0x20] sm:$0xff] %vm652, %v2780
      %2813 = vst.msk [vmem:[%s498 + $0x28] sm:$0xff] %vm652, %v2781
      %2814 = vst.msk [vmem:[%s498 + $0x30] sm:$0xff] %vm652, %v2782
      %2815 = vst.msk [vmem:[%s498 + $0x38] sm:$0xff] %vm652, %v2783
      %2816 = vst.msk [vmem:[%s498 + $0x40] sm:$0xff] %vm652, %v2784
      %2817 = vst.msk [vmem:[%s498 + $0x48] sm:$0xff] %vm652, %v2785
      %2818 = vst.msk [vmem:[%s498 + $0x50] sm:$0xff] %vm652, %v2786
      %2819 = vst.msk [vmem:[%s498 + $0x58] sm:$0xff] %vm652, %v2787
      %2820 = vst.msk [vmem:[%s498 + $0x60] sm:$0xff] %vm652, %v2788
      %2821 = vst.msk [vmem:[%s498 + $0x68] sm:$0xff] %vm652, %v2789
      %2822 = vst.msk [vmem:[%s498 + $0x70] sm:$0xff] %vm652, %v2790
      %2823 = vst.msk [vmem:[%s498 + $0x78] sm:$0xff] %vm652, %v2791
      %2824 = vst.msk [vmem:[%s498 + $0x80] sm:$0xff] %vm652, %v2792
      %2825 = vst.msk [vmem:[%s498 + $0x88] sm:$0xff] %vm652, %v2793
      %2826 = vst.msk [vmem:[%s498 + $0x90] sm:$0xff] %vm652, %v2794
      %2827 = vst.msk [vmem:[%s498 + $0x98] sm:$0xff] %vm652, %v2795
      %2828 = vst.msk [vmem:[%s498 + $0xa0] sm:$0xff] %vm652, %v2796
      %2829 = vst.msk [vmem:[%s498 + $0xa8] sm:$0xff] %vm652, %v2797
      %2830 = vst.msk [vmem:[%s498 + $0xb0] sm:$0xff] %vm652, %v2798
      %2831 = vst.msk [vmem:[%s498 + $0xb8] sm:$0xff] %vm652, %v2799
      %2832 = vst.msk [vmem:[%s498 + $0xc0] sm:$0xff] %vm652, %v2800
      %2833 = vst.msk [vmem:[%s498 + $0xc8] sm:$0xff] %vm652, %v2801
      %2834 = vst.msk [vmem:[%s498 + $0xd0] sm:$0xff] %vm652, %v2802
      %2835 = vst.msk [vmem:[%s498 + $0xd8] sm:$0xff] %vm652, %v2803
      %2836 = vst.msk [vmem:[%s498 + $0xe0] sm:$0xff] %vm652, %v2804
      %2837 = vst.msk [vmem:[%s498 + $0xe8] sm:$0xff] %vm652, %v2805
      %2838 = vst.msk [vmem:[%s498 + $0xf0] sm:$0xff] %vm652, %v2806
      %2839 = vst.msk [vmem:[%s498 + $0xf8] sm:$0xff] %vm652, %v2807
      %s2840 = smul.u32 32, %s25
      %p2841 = scmp.lt.s32.totalorder %s24, 1
      %s2842 = scalar_select %p2841, %s24, 1
      %p2843 = scmp.lt.s32.totalorder %s2840, 31
      %s2844 = scalar_select %p2843, %s2840, 31
      %s2845 = smul.addr %s2842, 32
      %s2846 = sadd.s32 %s2844, %s2845
      %s2847 = smul.addr %s2846, 8
      %s2848 = scalar_lea.vmem %s9, %s2847
      // Predicated region
      $region57: #{tpu_custom_call.1} parent=55 // pred_check
        %p2849 = pneg %p278
      $region58: #{tpu_custom_call.1} parent=55 // pred_check_branch
        %2851 = sbr.rel (%p2849) target = $region60
      $region59: #{tpu_custom_call.1} parent=55 // pred_region
        %s2852 = smul.u32 32, %s25
      $region60: #{tpu_custom_call.1} parent=55 // pred_fallthru
        _
    $region56: #{tpu_custom_call.1} parent=5 // pred_fallthru
      _
    %p2853 = scmp.le.s32.totalorder 2, %s15
    // Predicated region
    $region61: #{tpu_custom_call.1} parent=5 // pred_check
      %p2854 = pneg %p2853
    $region62: #{tpu_custom_call.1} parent=5 // pred_check_branch
      %2856 = sbr.rel (%p2854) target = $region64
    $region63: #{tpu_custom_call.1} parent=5 // pred_region
      %s2857 = ssub.s32 %s15, 2
      // Predicated region
      $region65: #{tpu_custom_call.1} parent=63 // pred_check
        %p2858 = pneg %p284
      $region66: #{tpu_custom_call.1} parent=63 // pred_check_branch
        %2860 = sbr.rel (%p2858) target = $region68
      $region67: #{tpu_custom_call.1} parent=63 // pred_region
        %s2861 = smul.u32 32, %s27
        %p2862 = scmp.lt.s32.totalorder %s26, 1
        %s2863 = scalar_select %p2862, %s26, 1
        %p2864 = scmp.lt.s32.totalorder %s2861, 31
        %s2865 = scalar_select %p2864, %s2861, 31
        %s2866 = smul.addr %s2863, 32
        %s2867 = sadd.s32 %s2865, %s2866
        %s2868 = smul.addr %s2867, 8
        %s2869 = scalar_lea.vmem %s9, %s2868
      $region68: #{tpu_custom_call.1} parent=63 // pred_fallthru
        _
    $region64: #{tpu_custom_call.1} parent=5 // pred_fallthru
      _
  $region6: #{tpu_custom_call.1} parent=0 // loop_footer
    %s19 = sadd.s32 1, %s15
  $region7: #{tpu_custom_call.1} parent=0 // loop_footer_branch
    %14 = sbr.rel target = $region3
  $region8: #{tpu_custom_call.1} parent=0 // loop_exit
    _

</llo_original>
